<compile_context>
chip_gen: v5e
topology: v5e:2x2
jax: 0.10.0
libtpu: 0.0.40
codegen_flags: <defaults>
</compile_context>

<pallas_src>
import functools

import jax
import jax.numpy as jnp
from jax.experimental import pallas as pl
from jax.experimental.pallas import tpu as pltpu

B_TILE = 128   # batch rows per grid step (>=128 keeps the MXU M-dim full)
LANE_W = 128   # lane width of the per-tile partial-sum output (unmasked vst)


def _round_up(n, m):
    return (n + m - 1) // m * m


def _nll_mlp_kernel(x_ref, y_ref, w1_ref, b1_ref, w2_ref, b2_ref, psum_ref):
    """One batch tile: Linear -> ReLU -> Linear -> LogSoftmax -> NLL -> tile sum.

    x_ref   : (B_TILE, D)      bfloat16   flattened input rows (zero-padded batch)
    y_ref   : (B_TILE, 1)      int32      labels (padded rows carry -1)
    w1_ref  : (D, H_pad)       bfloat16   VMEM-resident across the grid
    b1_ref  : (1, H_pad)       float32
    w2_ref  : (H_pad, C)       bfloat16
    b2_ref  : (1, C)           float32
    psum_ref: (1, LANE_W)      float32    per-tile NLL sum, broadcast across lanes
    """
    # Linear 1 (+ bias) + ReLU.  bf16 operands, f32 accumulation on the MXU.
    h = jnp.dot(x_ref[...], w1_ref[...], preferred_element_type=jnp.float32)
    h = jnp.maximum(h + b1_ref[...], 0.0)

    # Linear 2 -> logits (f32).
    logits = jnp.dot(h.astype(w2_ref.dtype), w2_ref[...],
                     preferred_element_type=jnp.float32) + b2_ref[...]

    # Numerically stable LogSoftmax over the class dim, kept in f32.
    m = jnp.max(logits, axis=-1, keepdims=True)
    z = logits - m
    lse = jnp.log(jnp.sum(jnp.exp(z), axis=-1, keepdims=True))
    logp = z - lse                                             # (B_TILE, C)

    # NLLLoss gather as an in-kernel iota == label mask (padded rows have
    # label -1 -> mask all False -> exactly 0 contribution).
    cls = jax.lax.broadcasted_iota(jnp.int32, logp.shape, 1)
    sel = cls == y_ref[...]
    nll = -jnp.sum(jnp.where(sel, logp, 0.0), axis=-1, keepdims=True)   # (B_TILE, 1)

    # Per-tile partial sum, lane-broadcast so the store is a full-width
    # unmasked vst (the final n_tiles-element reduction is done outside).
    tile_sum = jnp.sum(nll, axis=0, keepdims=True)             # (1, 1)
    psum_ref[...] = jnp.broadcast_to(tile_sum, psum_ref.shape)


def basemodel_forward(x_nchw, y, params, reduction="avg"):
    """Equivalent of basemodel.forward(x, y, reduction): returns a scalar loss."""
    w1, b1, w2, b2 = params
    B = x_nchw.shape[0]
    D, H = w1.shape
    C = w2.shape[1]

    B_pad = _round_up(B, B_TILE)
    H_pad = _round_up(H, 128)
    n_tiles = B_pad // B_TILE

    # Flatten NCHW row-major (matches torch .view(B, -1)); pad batch; cast
    # matmul operands to bf16.  Zero-padding the hidden dim keeps the math
    # exact (relu(0)=0 and the matching w2 rows are zero).
    x_flat = x_nchw.reshape(B, D)
    x_pad = jnp.zeros((B_pad, D), jnp.bfloat16).at[:B].set(x_flat.astype(jnp.bfloat16))
    y_pad = jnp.full((B_pad, 1), -1, jnp.int32).at[:B, 0].set(y.astype(jnp.int32))

    w1p = jnp.zeros((D, H_pad), jnp.bfloat16).at[:, :H].set(w1.astype(jnp.bfloat16))
    b1p = jnp.zeros((1, H_pad), jnp.float32).at[:, :H].set(b1.astype(jnp.float32))
    w2p = jnp.zeros((H_pad, C), jnp.bfloat16).at[:H].set(w2.astype(jnp.bfloat16))
    b2p = b2.astype(jnp.float32).reshape(1, C)

    psum = pl.pallas_call(
        _nll_mlp_kernel,
        out_shape=jax.ShapeDtypeStruct((n_tiles, LANE_W), jnp.float32),
        grid=(n_tiles,),
        in_specs=[
            pl.BlockSpec((B_TILE, D), lambda i: (i, 0)),   # x  : streamed per batch tile
            pl.BlockSpec((B_TILE, 1), lambda i: (i, 0)),   # y  : int32 labels per tile
            pl.BlockSpec((D, H_pad), lambda i: (0, 0)),    # w1 : constant block -> VMEM-resident
            pl.BlockSpec((1, H_pad), lambda i: (0, 0)),    # b1
            pl.BlockSpec((H_pad, C), lambda i: (0, 0)),    # w2
            pl.BlockSpec((1, C), lambda i: (0, 0)),        # b2
        ],
        out_specs=pl.BlockSpec((1, LANE_W), lambda i: (i, 0)),
        compiler_params=pltpu.CompilerParams(
            dimension_semantics=("parallel",)),            # shards tiles across TCs on v7x
    )(x_pad, y_pad, w1p, b1p, w2p, b2p)

    loss_sum = jnp.sum(psum[:, 0])                         # tiny (n_tiles,) reduction in XLA
    if reduction == "sum":
        return loss_sum
    return loss_sum / jnp.float32(B)                       # default 'avg' -> loss.mean()


def init_params(key, in_dim, hidden, num_classes):
    k1, k2 = jax.random.split(key)
    w1 = jax.random.normal(k1, (in_dim, hidden), jnp.float32) * (1.0 / jnp.sqrt(in_dim))
    b1 = jnp.zeros((1, hidden), jnp.float32)
    w2 = jax.random.normal(k2, (hidden, num_classes), jnp.float32) * (1.0 / jnp.sqrt(hidden))
    b2 = jnp.zeros((1, num_classes), jnp.float32)
    return w1, b1, w2, b2


if __name__ == "__main__":
    key = jax.random.PRNGKey(0)
    kx, ky, kp = jax.random.split(key, 3)

    B, Cin, Hs, Ws = 8, 4, 16, 16          # small NCHW input
    hidden = 32
    num_classes = 10
    in_dim = Cin * Hs * Ws

    x = jax.random.normal(kx, (B, Cin, Hs, Ws), jnp.float32)
    y = jax.random.randint(ky, (B,), 0, num_classes, jnp.int32)
    params = init_params(kp, in_dim, hidden, num_classes)

    fwd_avg = jax.jit(functools.partial(basemodel_forward, reduction="avg"))
    fwd_sum = jax.jit(functools.partial(basemodel_forward, reduction="sum"))
    loss_avg = fwd_avg(x, y, params)
    loss_sum = fwd_sum(x, y, params)
    jax.block_until_ready(loss_avg)
    jax.block_until_ready(loss_sum)

    # Pure-JAX reference with the same bf16-operand / f32-accumulate recipe.
    w1, b1, w2, b2 = params
    xb = x.reshape(B, -1).astype(jnp.bfloat16)
    hh = jnp.maximum(
        jnp.dot(xb, w1.astype(jnp.bfloat16), preferred_element_type=jnp.float32) + b1, 0.0)
    logits = jnp.dot(hh.astype(jnp.bfloat16), w2.astype(jnp.bfloat16),
                     preferred_element_type=jnp.float32) + b2
    logp = jax.nn.log_softmax(logits, axis=-1)
    ref_none = -jnp.take_along_axis(logp, y[:, None], axis=1)[:, 0]
    assert jnp.allclose(loss_avg, ref_none.mean(), atol=1e-3, rtol=1e-3)
    assert jnp.allclose(loss_sum, ref_none.sum(), atol=1e-3, rtol=1e-3)

    # Loose check against the full-f32 module semantics (bf16 matmul rounding only).
    hh32 = jnp.maximum(x.reshape(B, -1) @ w1 + b1, 0.0)
    logp32 = jax.nn.log_softmax(hh32 @ w2 + b2, axis=-1)
    ref32 = -jnp.take_along_axis(logp32, y[:, None], axis=1)[:, 0]
    assert jnp.allclose(loss_avg, ref32.mean(), atol=5e-2, rtol=5e-2)

    print("KERNEL_OK")
</pallas_src>

<mosaic_0001>
module attributes {stable_mosaic.version = 11 : i64} {
  func.func @_nll_mlp_kernel(%arg0: i32, %arg1: memref<128x1024xbf16, #tpu.memory_space<vmem>>, %arg2: memref<128x1xi32, #tpu.memory_space<vmem>>, %arg3: memref<1024x128xbf16, #tpu.memory_space<vmem>>, %arg4: memref<1x128xf32, #tpu.memory_space<vmem>>, %arg5: memref<128x10xbf16, #tpu.memory_space<vmem>>, %arg6: memref<1x10xf32, #tpu.memory_space<vmem>>, %arg7: memref<1x128xf32, #tpu.memory_space<vmem>>) attributes {dimension_semantics = [#tpu.dimension_semantics<parallel>], iteration_bounds = array<i64: 1>, scalar_prefetch = 0 : i64, scratch_operands = 0 : i64, tpu.core_type = #tpu.core_type<tc>, window_params = [{transform_indices = @transform_0, window_bounds = array<i64: 128, 1024>}, {transform_indices = @transform_1, window_bounds = array<i64: 128, 1>}, {pipeline_mode = #tpu.pipeline_mode<synchronous>, transform_indices = @transform_2, window_bounds = array<i64: 1024, 128>}, {pipeline_mode = #tpu.pipeline_mode<synchronous>, transform_indices = @transform_3, window_bounds = array<i64: 1, 128>}, {pipeline_mode = #tpu.pipeline_mode<synchronous>, transform_indices = @transform_4, window_bounds = array<i64: 128, 10>}, {pipeline_mode = #tpu.pipeline_mode<synchronous>, transform_indices = @transform_5, window_bounds = array<i64: 1, 10>}, {transform_indices = @transform_6, window_bounds = array<i64: 1, 128>}]} {
    %c0 = arith.constant 0 : index
    %c0_0 = arith.constant 0 : index
    %0 = vector.load %arg1[%c0, %c0_0] : memref<128x1024xbf16, #tpu.memory_space<vmem>>, vector<128x1024xbf16>
    %c0_1 = arith.constant 0 : index
    %c0_2 = arith.constant 0 : index
    %1 = vector.load %arg3[%c0_1, %c0_2] : memref<1024x128xbf16, #tpu.memory_space<vmem>>, vector<1024x128xbf16>
    %cst = arith.constant dense<0.000000e+00> : vector<128x128xf32>
    %2 = tpu.matmul %0, %1, %cst {dimension_numbers = #tpu.dot_dimension_numbers<[1], [0], [0], [1], [0, 0, 1, 1], [], []>} : vector<128x1024xbf16>, vector<1024x128xbf16>, vector<128x128xf32> -> vector<128x128xf32>
    %c0_3 = arith.constant 0 : index
    %c0_4 = arith.constant 0 : index
    %3 = vector.load %arg4[%c0_3, %c0_4] : memref<1x128xf32, #tpu.memory_space<vmem>>, vector<1x128xf32>
    %4 = vector.broadcast %3 : vector<1x128xf32> to vector<128x128xf32>
    %5 = arith.addf %2, %4 : vector<128x128xf32>
    %cst_5 = arith.constant 0.000000e+00 : f32
    %6 = vector.broadcast %cst_5 : f32 to vector<128x128xf32>
    %7 = arith.maximumf %5, %6 : vector<128x128xf32>
    %8 = arith.truncf %7 : vector<128x128xf32> to vector<128x128xbf16>
    %c0_6 = arith.constant 0 : index
    %c0_7 = arith.constant 0 : index
    %9 = vector.load %arg5[%c0_6, %c0_7] : memref<128x10xbf16, #tpu.memory_space<vmem>>, vector<128x10xbf16>
    %cst_8 = arith.constant dense<0.000000e+00> : vector<128x10xf32>
    %10 = tpu.matmul %8, %9, %cst_8 {dimension_numbers = #tpu.dot_dimension_numbers<[1], [0], [0], [1], [0, 0, 1, 1], [], []>} : vector<128x128xbf16>, vector<128x10xbf16>, vector<128x10xf32> -> vector<128x10xf32>
    %c0_9 = arith.constant 0 : index
    %c0_10 = arith.constant 0 : index
    %11 = vector.load %arg6[%c0_9, %c0_10] : memref<1x10xf32, #tpu.memory_space<vmem>>, vector<1x10xf32>
    %12 = vector.broadcast %11 : vector<1x10xf32> to vector<128x10xf32>
    %13 = arith.addf %10, %12 : vector<128x10xf32>
    %cst_11 = arith.constant dense<0xFF800000> : vector<128xf32>
    %14 = vector.multi_reduction <maximumf>, %13, %cst_11 [1] : vector<128x10xf32> to vector<128xf32>
    %15 = vector.shape_cast %14 : vector<128xf32> to vector<128x1xf32>
    %16 = vector.broadcast %15 : vector<128x1xf32> to vector<128x10xf32>
    %17 = arith.subf %13, %16 : vector<128x10xf32>
    %18 = math.exp %17 : vector<128x10xf32>
    %cst_12 = arith.constant dense<0.000000e+00> : vector<128xf32>
    %19 = vector.multi_reduction <add>, %18, %cst_12 [1] : vector<128x10xf32> to vector<128xf32>
    %20 = vector.shape_cast %19 : vector<128xf32> to vector<128x1xf32>
    %21 = math.log %20 : vector<128x1xf32>
    %22 = vector.broadcast %21 : vector<128x1xf32> to vector<128x10xf32>
    %23 = arith.subf %17, %22 : vector<128x10xf32>
    %24 = tpu.iota {dimensions = array<i32: 1>} : vector<128x10xi32>
    %c0_13 = arith.constant 0 : index
    %c0_14 = arith.constant 0 : index
    %25 = vector.load %arg2[%c0_13, %c0_14] : memref<128x1xi32, #tpu.memory_space<vmem>>, vector<128x1xi32>
    %26 = vector.broadcast %25 : vector<128x1xi32> to vector<128x10xi32>
    %27 = arith.cmpi eq, %24, %26 : vector<128x10xi32>
    %cst_15 = arith.constant 0.000000e+00 : f32
    %28 = vector.broadcast %cst_15 : f32 to vector<128x10xf32>
    %29 = arith.select %27, %23, %28 : vector<128x10xi1>, vector<128x10xf32>
    %cst_16 = arith.constant dense<0.000000e+00> : vector<128xf32>
    %30 = vector.multi_reduction <add>, %29, %cst_16 [1] : vector<128x10xf32> to vector<128xf32>
    %31 = vector.shape_cast %30 : vector<128xf32> to vector<128x1xf32>
    %cst_17 = arith.constant 0.000000e+00 : f32
    %32 = vector.broadcast %cst_17 : f32 to vector<128x1xf32>
    %33 = arith.subf %32, %31 : vector<128x1xf32>
    %cst_18 = arith.constant dense<0.000000e+00> : vector<1xf32>
    %34 = vector.multi_reduction <add>, %33, %cst_18 [0] : vector<128x1xf32> to vector<1xf32>
    %35 = vector.shape_cast %34 : vector<1xf32> to vector<1x1xf32>
    %36 = vector.shape_cast %35 : vector<1x1xf32> to vector<1x1xf32>
    %37 = vector.broadcast %36 : vector<1x1xf32> to vector<1x128xf32>
    %c0_19 = arith.constant 0 : index
    %c0_20 = arith.constant 0 : index
    %38 = vector.load %arg7[%c0_19, %c0_20] : memref<1x128xf32, #tpu.memory_space<vmem>>, vector<1x128xf32>
    tpu.vector_store %arg7[%c0_19, %c0_20], %37 {strides = array<i32>} : memref<1x128xf32, #tpu.memory_space<vmem>>, vector<1x128xf32>,
    return
  }
  func.func @transform_0(%arg0: i32) -> (i32, i32) {
    %c0_i32 = arith.constant 0 : i32
    %c0_i32_0 = arith.constant 0 : i32
    return %arg0, %c0_i32 : i32, i32
  }
  func.func @transform_1(%arg0: i32) -> (i32, i32) {
    %c0_i32 = arith.constant 0 : i32
    %c0_i32_0 = arith.constant 0 : i32
    return %arg0, %c0_i32 : i32, i32
  }
  func.func @transform_2(%arg0: i32) -> (i32, i32) {
    %c0_i32 = arith.constant 0 : i32
    %c0_i32_0 = arith.constant 0 : i32
    %c0_i32_1 = arith.constant 0 : i32
    return %c0_i32, %c0_i32_0 : i32, i32
  }
  func.func @transform_3(%arg0: i32) -> (i32, i32) {
    %c0_i32 = arith.constant 0 : i32
    %c0_i32_0 = arith.constant 0 : i32
    %c0_i32_1 = arith.constant 0 : i32
    return %c0_i32, %c0_i32_0 : i32, i32
  }
  func.func @transform_4(%arg0: i32) -> (i32, i32) {
    %c0_i32 = arith.constant 0 : i32
    %c0_i32_0 = arith.constant 0 : i32
    %c0_i32_1 = arith.constant 0 : i32
    return %c0_i32, %c0_i32_0 : i32, i32
  }
  func.func @transform_5(%arg0: i32) -> (i32, i32) {
    %c0_i32 = arith.constant 0 : i32
    %c0_i32_0 = arith.constant 0 : i32
    %c0_i32_1 = arith.constant 0 : i32
    return %c0_i32, %c0_i32_0 : i32, i32
  }
  func.func @transform_6(%arg0: i32) -> (i32, i32) {
    %c0_i32 = arith.constant 0 : i32
    %c0_i32_0 = arith.constant 0 : i32
    return %arg0, %c0_i32 : i32, i32
  }
}

</mosaic_0001>

<llo_original>
// kernel: basemodel_forward.1
$region0: #{basemodel_forward.1}
  #allocation0 [shape = 'u32[]', space=smem, size = 0x4, offset = 0x4, fixed_abs, tag = 'smem constant byte address 0x4 - core index']
  #allocation1 [shape = 'u32[72,128]{1,0:T(1,128)}', space=vmem, size = 0x9000, scoped, tag = 'internal scratch']
  %s0 = inlined_call_operand.vmem [shape: bf16[128,1024], index: 0, kind: input, shape index: {}]
  %s1 = inlined_call_operand.vmem [shape: s32[128,1], index: 1, kind: input, shape index: {}]
  %s2 = inlined_call_operand.vmem [shape: bf16[1024,128], index: 2, kind: input, shape index: {}]
  %s3 = inlined_call_operand.vmem [shape: f32[1,128], index: 3, kind: input, shape index: {}]
  %s4 = inlined_call_operand.vmem [shape: bf16[128,10], index: 4, kind: input, shape index: {}]
  %s5 = inlined_call_operand.vmem [shape: f32[1,10], index: 5, kind: input, shape index: {}]
  %s6 = inlined_call_operand.vmem [shape: f32[1,128], index: 6, kind: output, shape index: {}]
  %s7 = sld [smem:[#allocation0]]
  $region34: #{basemodel_forward.1} parent=0
    _
  %s9 = ssub.s32 1, %s7
  %s10 = scalar_select 0, %s9, %s7
  // Predicated region
  $region2: #{basemodel_forward.1} parent=0 // pred_check
    _
  $region3: #{basemodel_forward.1} parent=0 // pred_check_branch
    %12 = sbr.rel (0) target = $region5
  $region4: #{basemodel_forward.1} parent=0 // pred_region
    _
  $region5: #{basemodel_forward.1} parent=0 // pred_fallthru
    _
  // Predicated region
  $region6: #{basemodel_forward.1} parent=0 // pred_check
    _
  $region7: #{basemodel_forward.1} parent=0 // pred_check_branch
    %14 = sbr.rel (0) target = $region9
  $region8: #{basemodel_forward.1} parent=0 // pred_region
    _
  $region9: #{basemodel_forward.1} parent=0 // pred_fallthru
    _
  // Predicated region
  $region10: #{basemodel_forward.1} parent=0 // pred_check
    _
  $region11: #{basemodel_forward.1} parent=0 // pred_check_branch
    %16 = sbr.rel (0) target = $region13
  $region12: #{basemodel_forward.1} parent=0 // pred_region
    _
  $region13: #{basemodel_forward.1} parent=0 // pred_fallthru
    _
  // Predicated region
  $region14: #{basemodel_forward.1} parent=0 // pred_check
    _
  $region15: #{basemodel_forward.1} parent=0 // pred_check_branch
    %18 = sbr.rel (0) target = $region17
  $region16: #{basemodel_forward.1} parent=0 // pred_region
    _
  $region17: #{basemodel_forward.1} parent=0 // pred_fallthru
    _
  // Predicated region
  $region18: #{basemodel_forward.1} parent=0 // pred_check
    _
  $region19: #{basemodel_forward.1} parent=0 // pred_check_branch
    %20 = sbr.rel (0) target = $region21
  $region20: #{basemodel_forward.1} parent=0 // pred_region
    _
  $region21: #{basemodel_forward.1} parent=0 // pred_fallthru
    _
  // Predicated region
  $region22: #{basemodel_forward.1} parent=0 // pred_check
    _
  $region23: #{basemodel_forward.1} parent=0 // pred_check_branch
    %22 = sbr.rel (0) target = $region25
  $region24: #{basemodel_forward.1} parent=0 // pred_region
    _
  $region25: #{basemodel_forward.1} parent=0 // pred_fallthru
    _
  %v23 = vld [vmem:[%s0] sm:$0xff]
  %v24 = vld [vmem:[%s0 + $0x8] sm:$0xff]
  %v25 = vld [vmem:[%s0 + $0x10] sm:$0xff]
  %v26 = vld [vmem:[%s0 + $0x18] sm:$0xff]
  %v27 = vld [vmem:[%s0 + $0x20] sm:$0xff]
  %v28 = vld [vmem:[%s0 + $0x28] sm:$0xff]
  %v29 = vld [vmem:[%s0 + $0x30] sm:$0xff]
  %v30 = vld [vmem:[%s0 + $0x38] sm:$0xff]
  %v31 = vld [vmem:[%s0 + $0x40] sm:$0xff]
  %v32 = vld [vmem:[%s0 + $0x48] sm:$0xff]
  %v33 = vld [vmem:[%s0 + $0x50] sm:$0xff]
  %v34 = vld [vmem:[%s0 + $0x58] sm:$0xff]
  %v35 = vld [vmem:[%s0 + $0x60] sm:$0xff]
  %v36 = vld [vmem:[%s0 + $0x68] sm:$0xff]
  %v37 = vld [vmem:[%s0 + $0x70] sm:$0xff]
  %v38 = vld [vmem:[%s0 + $0x78] sm:$0xff]
  %v39 = vld [vmem:[%s0 + $0x80] sm:$0xff]
  %v40 = vld [vmem:[%s0 + $0x88] sm:$0xff]
  %v41 = vld [vmem:[%s0 + $0x90] sm:$0xff]
  %v42 = vld [vmem:[%s0 + $0x98] sm:$0xff]
  %v43 = vld [vmem:[%s0 + $0xa0] sm:$0xff]
  %v44 = vld [vmem:[%s0 + $0xa8] sm:$0xff]
  %v45 = vld [vmem:[%s0 + $0xb0] sm:$0xff]
  %v46 = vld [vmem:[%s0 + $0xb8] sm:$0xff]
  %v47 = vld [vmem:[%s0 + $0xc0] sm:$0xff]
  %v48 = vld [vmem:[%s0 + $0xc8] sm:$0xff]
  %v49 = vld [vmem:[%s0 + $0xd0] sm:$0xff]
  %v50 = vld [vmem:[%s0 + $0xd8] sm:$0xff]
  %v51 = vld [vmem:[%s0 + $0xe0] sm:$0xff]
  %v52 = vld [vmem:[%s0 + $0xe8] sm:$0xff]
  %v53 = vld [vmem:[%s0 + $0xf0] sm:$0xff]
  %v54 = vld [vmem:[%s0 + $0xf8] sm:$0xff]
  %v55 = vld [vmem:[%s0 + $0x100] sm:$0xff]
  %v56 = vld [vmem:[%s0 + $0x108] sm:$0xff]
  %v57 = vld [vmem:[%s0 + $0x110] sm:$0xff]
  %v58 = vld [vmem:[%s0 + $0x118] sm:$0xff]
  %v59 = vld [vmem:[%s0 + $0x120] sm:$0xff]
  %v60 = vld [vmem:[%s0 + $0x128] sm:$0xff]
  %v61 = vld [vmem:[%s0 + $0x130] sm:$0xff]
  %v62 = vld [vmem:[%s0 + $0x138] sm:$0xff]
  %v63 = vld [vmem:[%s0 + $0x140] sm:$0xff]
  %v64 = vld [vmem:[%s0 + $0x148] sm:$0xff]
  %v65 = vld [vmem:[%s0 + $0x150] sm:$0xff]
  %v66 = vld [vmem:[%s0 + $0x158] sm:$0xff]
  %v67 = vld [vmem:[%s0 + $0x160] sm:$0xff]
  %v68 = vld [vmem:[%s0 + $0x168] sm:$0xff]
  %v69 = vld [vmem:[%s0 + $0x170] sm:$0xff]
  %v70 = vld [vmem:[%s0 + $0x178] sm:$0xff]
  %v71 = vld [vmem:[%s0 + $0x180] sm:$0xff]
  %v72 = vld [vmem:[%s0 + $0x188] sm:$0xff]
  %v73 = vld [vmem:[%s0 + $0x190] sm:$0xff]
  %v74 = vld [vmem:[%s0 + $0x198] sm:$0xff]
  %v75 = vld [vmem:[%s0 + $0x1a0] sm:$0xff]
  %v76 = vld [vmem:[%s0 + $0x1a8] sm:$0xff]
  %v77 = vld [vmem:[%s0 + $0x1b0] sm:$0xff]
  %v78 = vld [vmem:[%s0 + $0x1b8] sm:$0xff]
  %v79 = vld [vmem:[%s0 + $0x1c0] sm:$0xff]
  %v80 = vld [vmem:[%s0 + $0x1c8] sm:$0xff]
  %v81 = vld [vmem:[%s0 + $0x1d0] sm:$0xff]
  %v82 = vld [vmem:[%s0 + $0x1d8] sm:$0xff]
  %v83 = vld [vmem:[%s0 + $0x1e0] sm:$0xff]
  %v84 = vld [vmem:[%s0 + $0x1e8] sm:$0xff]
  %v85 = vld [vmem:[%s0 + $0x1f0] sm:$0xff]
  %v86 = vld [vmem:[%s0 + $0x1f8] sm:$0xff]
  %v87 = vld [vmem:[%s2] sm:$0xf]
  %v88 = vld [vmem:[%s2 + $0x4] sm:$0xf]
  %v89 = vld [vmem:[%s2 + $0x8] sm:$0xf]
  %v90 = vld [vmem:[%s2 + $0xc] sm:$0xf]
  %v91 = vld [vmem:[%s2 + $0x10] sm:$0xf]
  %v92 = vld [vmem:[%s2 + $0x14] sm:$0xf]
  %v93 = vld [vmem:[%s2 + $0x18] sm:$0xf]
  %v94 = vld [vmem:[%s2 + $0x1c] sm:$0xf]
  %v95 = vld [vmem:[%s2 + $0x20] sm:$0xf]
  %v96 = vld [vmem:[%s2 + $0x24] sm:$0xf]
  %v97 = vld [vmem:[%s2 + $0x28] sm:$0xf]
  %v98 = vld [vmem:[%s2 + $0x2c] sm:$0xf]
  %v99 = vld [vmem:[%s2 + $0x30] sm:$0xf]
  %v100 = vld [vmem:[%s2 + $0x34] sm:$0xf]
  %v101 = vld [vmem:[%s2 + $0x38] sm:$0xf]
  %v102 = vld [vmem:[%s2 + $0x3c] sm:$0xf]
  %v103 = vld [vmem:[%s2 + $0x40] sm:$0xf]
  %v104 = vld [vmem:[%s2 + $0x44] sm:$0xf]
  %v105 = vld [vmem:[%s2 + $0x48] sm:$0xf]
  %v106 = vld [vmem:[%s2 + $0x4c] sm:$0xf]
  %v107 = vld [vmem:[%s2 + $0x50] sm:$0xf]
  %v108 = vld [vmem:[%s2 + $0x54] sm:$0xf]
  %v109 = vld [vmem:[%s2 + $0x58] sm:$0xf]
  %v110 = vld [vmem:[%s2 + $0x5c] sm:$0xf]
  %v111 = vld [vmem:[%s2 + $0x60] sm:$0xf]
  %v112 = vld [vmem:[%s2 + $0x64] sm:$0xf]
  %v113 = vld [vmem:[%s2 + $0x68] sm:$0xf]
  %v114 = vld [vmem:[%s2 + $0x6c] sm:$0xf]
  %v115 = vld [vmem:[%s2 + $0x70] sm:$0xf]
  %v116 = vld [vmem:[%s2 + $0x74] sm:$0xf]
  %v117 = vld [vmem:[%s2 + $0x78] sm:$0xf]
  %v118 = vld [vmem:[%s2 + $0x7c] sm:$0xf]
  %v119 = vld [vmem:[%s2 + $0x80] sm:$0xf]
  %v120 = vld [vmem:[%s2 + $0x84] sm:$0xf]
  %v121 = vld [vmem:[%s2 + $0x88] sm:$0xf]
  %v122 = vld [vmem:[%s2 + $0x8c] sm:$0xf]
  %v123 = vld [vmem:[%s2 + $0x90] sm:$0xf]
  %v124 = vld [vmem:[%s2 + $0x94] sm:$0xf]
  %v125 = vld [vmem:[%s2 + $0x98] sm:$0xf]
  %v126 = vld [vmem:[%s2 + $0x9c] sm:$0xf]
  %v127 = vld [vmem:[%s2 + $0xa0] sm:$0xf]
  %v128 = vld [vmem:[%s2 + $0xa4] sm:$0xf]
  %v129 = vld [vmem:[%s2 + $0xa8] sm:$0xf]
  %v130 = vld [vmem:[%s2 + $0xac] sm:$0xf]
  %v131 = vld [vmem:[%s2 + $0xb0] sm:$0xf]
  %v132 = vld [vmem:[%s2 + $0xb4] sm:$0xf]
  %v133 = vld [vmem:[%s2 + $0xb8] sm:$0xf]
  %v134 = vld [vmem:[%s2 + $0xbc] sm:$0xf]
  %v135 = vld [vmem:[%s2 + $0xc0] sm:$0xf]
  %v136 = vld [vmem:[%s2 + $0xc4] sm:$0xf]
  %v137 = vld [vmem:[%s2 + $0xc8] sm:$0xf]
  %v138 = vld [vmem:[%s2 + $0xcc] sm:$0xf]
  %v139 = vld [vmem:[%s2 + $0xd0] sm:$0xf]
  %v140 = vld [vmem:[%s2 + $0xd4] sm:$0xf]
  %v141 = vld [vmem:[%s2 + $0xd8] sm:$0xf]
  %v142 = vld [vmem:[%s2 + $0xdc] sm:$0xf]
  %v143 = vld [vmem:[%s2 + $0xe0] sm:$0xf]
  %v144 = vld [vmem:[%s2 + $0xe4] sm:$0xf]
  %v145 = vld [vmem:[%s2 + $0xe8] sm:$0xf]
  %v146 = vld [vmem:[%s2 + $0xec] sm:$0xf]
  %v147 = vld [vmem:[%s2 + $0xf0] sm:$0xf]
  %v148 = vld [vmem:[%s2 + $0xf4] sm:$0xf]
  %v149 = vld [vmem:[%s2 + $0xf8] sm:$0xf]
  %v150 = vld [vmem:[%s2 + $0xfc] sm:$0xf]
  %v151 = vld [vmem:[%s2 + $0x100] sm:$0xf]
  %v152 = vld [vmem:[%s2 + $0x104] sm:$0xf]
  %v153 = vld [vmem:[%s2 + $0x108] sm:$0xf]
  %v154 = vld [vmem:[%s2 + $0x10c] sm:$0xf]
  %v155 = vld [vmem:[%s2 + $0x110] sm:$0xf]
  %v156 = vld [vmem:[%s2 + $0x114] sm:$0xf]
  %v157 = vld [vmem:[%s2 + $0x118] sm:$0xf]
  %v158 = vld [vmem:[%s2 + $0x11c] sm:$0xf]
  %v159 = vld [vmem:[%s2 + $0x120] sm:$0xf]
  %v160 = vld [vmem:[%s2 + $0x124] sm:$0xf]
  %v161 = vld [vmem:[%s2 + $0x128] sm:$0xf]
  %v162 = vld [vmem:[%s2 + $0x12c] sm:$0xf]
  %v163 = vld [vmem:[%s2 + $0x130] sm:$0xf]
  %v164 = vld [vmem:[%s2 + $0x134] sm:$0xf]
  %v165 = vld [vmem:[%s2 + $0x138] sm:$0xf]
  %v166 = vld [vmem:[%s2 + $0x13c] sm:$0xf]
  %v167 = vld [vmem:[%s2 + $0x140] sm:$0xf]
  %v168 = vld [vmem:[%s2 + $0x144] sm:$0xf]
  %v169 = vld [vmem:[%s2 + $0x148] sm:$0xf]
  %v170 = vld [vmem:[%s2 + $0x14c] sm:$0xf]
  %v171 = vld [vmem:[%s2 + $0x150] sm:$0xf]
  %v172 = vld [vmem:[%s2 + $0x154] sm:$0xf]
  %v173 = vld [vmem:[%s2 + $0x158] sm:$0xf]
  %v174 = vld [vmem:[%s2 + $0x15c] sm:$0xf]
  %v175 = vld [vmem:[%s2 + $0x160] sm:$0xf]
  %v176 = vld [vmem:[%s2 + $0x164] sm:$0xf]
  %v177 = vld [vmem:[%s2 + $0x168] sm:$0xf]
  %v178 = vld [vmem:[%s2 + $0x16c] sm:$0xf]
  %v179 = vld [vmem:[%s2 + $0x170] sm:$0xf]
  %v180 = vld [vmem:[%s2 + $0x174] sm:$0xf]
  %v181 = vld [vmem:[%s2 + $0x178] sm:$0xf]
  %v182 = vld [vmem:[%s2 + $0x17c] sm:$0xf]
  %v183 = vld [vmem:[%s2 + $0x180] sm:$0xf]
  %v184 = vld [vmem:[%s2 + $0x184] sm:$0xf]
  %v185 = vld [vmem:[%s2 + $0x188] sm:$0xf]
  %v186 = vld [vmem:[%s2 + $0x18c] sm:$0xf]
  %v187 = vld [vmem:[%s2 + $0x190] sm:$0xf]
  %v188 = vld [vmem:[%s2 + $0x194] sm:$0xf]
  %v189 = vld [vmem:[%s2 + $0x198] sm:$0xf]
  %v190 = vld [vmem:[%s2 + $0x19c] sm:$0xf]
  %v191 = vld [vmem:[%s2 + $0x1a0] sm:$0xf]
  %v192 = vld [vmem:[%s2 + $0x1a4] sm:$0xf]
  %v193 = vld [vmem:[%s2 + $0x1a8] sm:$0xf]
  %v194 = vld [vmem:[%s2 + $0x1ac] sm:$0xf]
  %v195 = vld [vmem:[%s2 + $0x1b0] sm:$0xf]
  %v196 = vld [vmem:[%s2 + $0x1b4] sm:$0xf]
  %v197 = vld [vmem:[%s2 + $0x1b8] sm:$0xf]
  %v198 = vld [vmem:[%s2 + $0x1bc] sm:$0xf]
  %v199 = vld [vmem:[%s2 + $0x1c0] sm:$0xf]
  %v200 = vld [vmem:[%s2 + $0x1c4] sm:$0xf]
  %v201 = vld [vmem:[%s2 + $0x1c8] sm:$0xf]
  %v202 = vld [vmem:[%s2 + $0x1cc] sm:$0xf]
  %v203 = vld [vmem:[%s2 + $0x1d0] sm:$0xf]
  %v204 = vld [vmem:[%s2 + $0x1d4] sm:$0xf]
  %v205 = vld [vmem:[%s2 + $0x1d8] sm:$0xf]
  %v206 = vld [vmem:[%s2 + $0x1dc] sm:$0xf]
  %v207 = vld [vmem:[%s2 + $0x1e0] sm:$0xf]
  %v208 = vld [vmem:[%s2 + $0x1e4] sm:$0xf]
  %v209 = vld [vmem:[%s2 + $0x1e8] sm:$0xf]
  %v210 = vld [vmem:[%s2 + $0x1ec] sm:$0xf]
  %v211 = vld [vmem:[%s2 + $0x1f0] sm:$0xf]
  %v212 = vld [vmem:[%s2 + $0x1f4] sm:$0xf]
  %v213 = vld [vmem:[%s2 + $0x1f8] sm:$0xf]
  %v214 = vld [vmem:[%s2 + $0x1fc] sm:$0xf]
  %v215 = vld [vmem:[%s3] sm:$0x1]
  %v217 = vperm.slane %v215, 0
  %v283 = vunpack.c.l.b16 %v23
  %v284 = vunpack.c.h.b16 %v23
  %v285 = vunpack.c.l.b16 %v24
  %v286 = vunpack.c.h.b16 %v24
  %v287 = vunpack.c.l.b16 %v25
  %v288 = vunpack.c.h.b16 %v25
  %v289 = vunpack.c.l.b16 %v26
  %v290 = vunpack.c.h.b16 %v26
  %v291 = vunpack.c.l.b16 %v27
  %v292 = vunpack.c.h.b16 %v27
  %v293 = vunpack.c.l.b16 %v28
  %v294 = vunpack.c.h.b16 %v28
  %v295 = vunpack.c.l.b16 %v29
  %v296 = vunpack.c.h.b16 %v29
  %v297 = vunpack.c.l.b16 %v30
  %v298 = vunpack.c.h.b16 %v30
  %v299 = vunpack.c.l.b16 %v31
  %v300 = vunpack.c.h.b16 %v31
  %v301 = vunpack.c.l.b16 %v32
  %v302 = vunpack.c.h.b16 %v32
  %v303 = vunpack.c.l.b16 %v33
  %v304 = vunpack.c.h.b16 %v33
  %v305 = vunpack.c.l.b16 %v34
  %v306 = vunpack.c.h.b16 %v34
  %v307 = vunpack.c.l.b16 %v35
  %v308 = vunpack.c.h.b16 %v35
  %v309 = vunpack.c.l.b16 %v36
  %v310 = vunpack.c.h.b16 %v36
  %v311 = vunpack.c.l.b16 %v37
  %v312 = vunpack.c.h.b16 %v37
  %v313 = vunpack.c.l.b16 %v38
  %v314 = vunpack.c.h.b16 %v38
  %v315 = vunpack.c.l.b16 %v39
  %v316 = vunpack.c.h.b16 %v39
  %v317 = vunpack.c.l.b16 %v40
  %v318 = vunpack.c.h.b16 %v40
  %v319 = vunpack.c.l.b16 %v41
  %v320 = vunpack.c.h.b16 %v41
  %v321 = vunpack.c.l.b16 %v42
  %v322 = vunpack.c.h.b16 %v42
  %v323 = vunpack.c.l.b16 %v43
  %v324 = vunpack.c.h.b16 %v43
  %v325 = vunpack.c.l.b16 %v44
  %v326 = vunpack.c.h.b16 %v44
  %v327 = vunpack.c.l.b16 %v45
  %v328 = vunpack.c.h.b16 %v45
  %v329 = vunpack.c.l.b16 %v46
  %v330 = vunpack.c.h.b16 %v46
  %v331 = vunpack.c.l.b16 %v47
  %v332 = vunpack.c.h.b16 %v47
  %v333 = vunpack.c.l.b16 %v48
  %v334 = vunpack.c.h.b16 %v48
  %v335 = vunpack.c.l.b16 %v49
  %v336 = vunpack.c.h.b16 %v49
  %v337 = vunpack.c.l.b16 %v50
  %v338 = vunpack.c.h.b16 %v50
  %v339 = vunpack.c.l.b16 %v51
  %v340 = vunpack.c.h.b16 %v51
  %v341 = vunpack.c.l.b16 %v52
  %v342 = vunpack.c.h.b16 %v52
  %v343 = vunpack.c.l.b16 %v53
  %v344 = vunpack.c.h.b16 %v53
  %v345 = vunpack.c.l.b16 %v54
  %v346 = vunpack.c.h.b16 %v54
  %v347 = vunpack.c.l.b16 %v55
  %v348 = vunpack.c.h.b16 %v55
  %v349 = vunpack.c.l.b16 %v56
  %v350 = vunpack.c.h.b16 %v56
  %v351 = vunpack.c.l.b16 %v57
  %v352 = vunpack.c.h.b16 %v57
  %v353 = vunpack.c.l.b16 %v58
  %v354 = vunpack.c.h.b16 %v58
  %v355 = vunpack.c.l.b16 %v59
  %v356 = vunpack.c.h.b16 %v59
  %v357 = vunpack.c.l.b16 %v60
  %v358 = vunpack.c.h.b16 %v60
  %v359 = vunpack.c.l.b16 %v61
  %v360 = vunpack.c.h.b16 %v61
  %v361 = vunpack.c.l.b16 %v62
  %v362 = vunpack.c.h.b16 %v62
  %v363 = vunpack.c.l.b16 %v63
  %v364 = vunpack.c.h.b16 %v63
  %v365 = vunpack.c.l.b16 %v64
  %v366 = vunpack.c.h.b16 %v64
  %v367 = vunpack.c.l.b16 %v65
  %v368 = vunpack.c.h.b16 %v65
  %v369 = vunpack.c.l.b16 %v66
  %v370 = vunpack.c.h.b16 %v66
  %v371 = vunpack.c.l.b16 %v67
  %v372 = vunpack.c.h.b16 %v67
  %v373 = vunpack.c.l.b16 %v68
  %v374 = vunpack.c.h.b16 %v68
  %v375 = vunpack.c.l.b16 %v69
  %v376 = vunpack.c.h.b16 %v69
  %v377 = vunpack.c.l.b16 %v70
  %v378 = vunpack.c.h.b16 %v70
  %v379 = vunpack.c.l.b16 %v71
  %v380 = vunpack.c.h.b16 %v71
  %v381 = vunpack.c.l.b16 %v72
  %v382 = vunpack.c.h.b16 %v72
  %v383 = vunpack.c.l.b16 %v73
  %v384 = vunpack.c.h.b16 %v73
  %v385 = vunpack.c.l.b16 %v74
  %v386 = vunpack.c.h.b16 %v74
  %v387 = vunpack.c.l.b16 %v75
  %v388 = vunpack.c.h.b16 %v75
  %v389 = vunpack.c.l.b16 %v76
  %v390 = vunpack.c.h.b16 %v76
  %v391 = vunpack.c.l.b16 %v77
  %v392 = vunpack.c.h.b16 %v77
  %v393 = vunpack.c.l.b16 %v78
  %v394 = vunpack.c.h.b16 %v78
  %v395 = vunpack.c.l.b16 %v79
  %v396 = vunpack.c.h.b16 %v79
  %v397 = vunpack.c.l.b16 %v80
  %v398 = vunpack.c.h.b16 %v80
  %v399 = vunpack.c.l.b16 %v81
  %v400 = vunpack.c.h.b16 %v81
  %v401 = vunpack.c.l.b16 %v82
  %v402 = vunpack.c.h.b16 %v82
  %v403 = vunpack.c.l.b16 %v83
  %v404 = vunpack.c.h.b16 %v83
  %v405 = vunpack.c.l.b16 %v84
  %v406 = vunpack.c.h.b16 %v84
  %v407 = vunpack.c.l.b16 %v85
  %v408 = vunpack.c.h.b16 %v85
  %v409 = vunpack.c.l.b16 %v86
  %v410 = vunpack.c.h.b16 %v86
  %v411 = vpack.c.b16 %v291, %v283
  %v412 = vpack.c.b16 %v292, %v284
  %v413 = vpack.c.b16 %v293, %v285
  %v414 = vpack.c.b16 %v294, %v286
  %v415 = vpack.c.b16 %v295, %v287
  %v416 = vpack.c.b16 %v296, %v288
  %v417 = vpack.c.b16 %v297, %v289
  %v418 = vpack.c.b16 %v298, %v290
  %v419 = vpack.c.b16 %v307, %v299
  %v420 = vpack.c.b16 %v308, %v300
  %v421 = vpack.c.b16 %v309, %v301
  %v422 = vpack.c.b16 %v310, %v302
  %v423 = vpack.c.b16 %v311, %v303
  %v424 = vpack.c.b16 %v312, %v304
  %v425 = vpack.c.b16 %v313, %v305
  %v426 = vpack.c.b16 %v314, %v306
  %v427 = vpack.c.b16 %v323, %v315
  %v428 = vpack.c.b16 %v324, %v316
  %v429 = vpack.c.b16 %v325, %v317
  %v430 = vpack.c.b16 %v326, %v318
  %v431 = vpack.c.b16 %v327, %v319
  %v432 = vpack.c.b16 %v328, %v320
  %v433 = vpack.c.b16 %v329, %v321
  %v434 = vpack.c.b16 %v330, %v322
  %v435 = vpack.c.b16 %v339, %v331
  %v436 = vpack.c.b16 %v340, %v332
  %v437 = vpack.c.b16 %v341, %v333
  %v438 = vpack.c.b16 %v342, %v334
  %v439 = vpack.c.b16 %v343, %v335
  %v440 = vpack.c.b16 %v344, %v336
  %v441 = vpack.c.b16 %v345, %v337
  %v442 = vpack.c.b16 %v346, %v338
  %v443 = vpack.c.b16 %v355, %v347
  %v444 = vpack.c.b16 %v356, %v348
  %v445 = vpack.c.b16 %v357, %v349
  %v446 = vpack.c.b16 %v358, %v350
  %v447 = vpack.c.b16 %v359, %v351
  %v448 = vpack.c.b16 %v360, %v352
  %v449 = vpack.c.b16 %v361, %v353
  %v450 = vpack.c.b16 %v362, %v354
  %v451 = vpack.c.b16 %v371, %v363
  %v452 = vpack.c.b16 %v372, %v364
  %v453 = vpack.c.b16 %v373, %v365
  %v454 = vpack.c.b16 %v374, %v366
  %v455 = vpack.c.b16 %v375, %v367
  %v456 = vpack.c.b16 %v376, %v368
  %v457 = vpack.c.b16 %v377, %v369
  %v458 = vpack.c.b16 %v378, %v370
  %v459 = vpack.c.b16 %v387, %v379
  %v460 = vpack.c.b16 %v388, %v380
  %v461 = vpack.c.b16 %v389, %v381
  %v462 = vpack.c.b16 %v390, %v382
  %v463 = vpack.c.b16 %v391, %v383
  %v464 = vpack.c.b16 %v392, %v384
  %v465 = vpack.c.b16 %v393, %v385
  %v466 = vpack.c.b16 %v394, %v386
  %v467 = vpack.c.b16 %v403, %v395
  %v468 = vpack.c.b16 %v404, %v396
  %v469 = vpack.c.b16 %v405, %v397
  %v470 = vpack.c.b16 %v406, %v398
  %v471 = vpack.c.b16 %v407, %v399
  %v472 = vpack.c.b16 %v408, %v400
  %v473 = vpack.c.b16 %v409, %v401
  %v474 = vpack.c.b16 %v410, %v402
  %v667 = vunpack.c.l.b16 %v87
  %v668 = vunpack.c.l.b16 %v88
  %v669 = vunpack.c.l.b16 %v89
  %v670 = vunpack.c.l.b16 %v90
  %v671 = vunpack.c.l.b16 %v91
  %v672 = vunpack.c.l.b16 %v92
  %v673 = vunpack.c.l.b16 %v93
  %v674 = vunpack.c.l.b16 %v94
  %v675 = vunpack.c.l.b16 %v95
  %v676 = vunpack.c.l.b16 %v96
  %v677 = vunpack.c.l.b16 %v97
  %v678 = vunpack.c.l.b16 %v98
  %v679 = vunpack.c.l.b16 %v99
  %v680 = vunpack.c.l.b16 %v100
  %v681 = vunpack.c.l.b16 %v101
  %v682 = vunpack.c.l.b16 %v102
  %v683 = vunpack.c.l.b16 %v103
  %v684 = vunpack.c.l.b16 %v104
  %v685 = vunpack.c.l.b16 %v105
  %v686 = vunpack.c.l.b16 %v106
  %v687 = vunpack.c.l.b16 %v107
  %v688 = vunpack.c.l.b16 %v108
  %v689 = vunpack.c.l.b16 %v109
  %v690 = vunpack.c.l.b16 %v110
  %v691 = vunpack.c.l.b16 %v111
  %v692 = vunpack.c.l.b16 %v112
  %v693 = vunpack.c.l.b16 %v113
  %v694 = vunpack.c.l.b16 %v114
  %v695 = vunpack.c.l.b16 %v115
  %v696 = vunpack.c.l.b16 %v116
  %v697 = vunpack.c.l.b16 %v117
  %v698 = vunpack.c.l.b16 %v118
  %v699 = vunpack.c.l.b16 %v119
  %v700 = vunpack.c.l.b16 %v120
  %v701 = vunpack.c.l.b16 %v121
  %v702 = vunpack.c.l.b16 %v122
  %v703 = vunpack.c.l.b16 %v123
  %v704 = vunpack.c.l.b16 %v124
  %v705 = vunpack.c.l.b16 %v125
  %v706 = vunpack.c.l.b16 %v126
  %v707 = vunpack.c.l.b16 %v127
  %v708 = vunpack.c.l.b16 %v128
  %v709 = vunpack.c.l.b16 %v129
  %v710 = vunpack.c.l.b16 %v130
  %v711 = vunpack.c.l.b16 %v131
  %v712 = vunpack.c.l.b16 %v132
  %v713 = vunpack.c.l.b16 %v133
  %v714 = vunpack.c.l.b16 %v134
  %v715 = vunpack.c.l.b16 %v135
  %v716 = vunpack.c.l.b16 %v136
  %v717 = vunpack.c.l.b16 %v137
  %v718 = vunpack.c.l.b16 %v138
  %v719 = vunpack.c.l.b16 %v139
  %v720 = vunpack.c.l.b16 %v140
  %v721 = vunpack.c.l.b16 %v141
  %v722 = vunpack.c.l.b16 %v142
  %v723 = vunpack.c.l.b16 %v143
  %v724 = vunpack.c.l.b16 %v144
  %v725 = vunpack.c.l.b16 %v145
  %v726 = vunpack.c.l.b16 %v146
  %v727 = vunpack.c.l.b16 %v147
  %v728 = vunpack.c.l.b16 %v148
  %v729 = vunpack.c.l.b16 %v149
  %v730 = vunpack.c.l.b16 %v150
  %v731 = vunpack.c.l.b16 %v151
  %v732 = vunpack.c.l.b16 %v152
  %v733 = vunpack.c.l.b16 %v153
  %v734 = vunpack.c.l.b16 %v154
  %v735 = vunpack.c.l.b16 %v155
  %v736 = vunpack.c.l.b16 %v156
  %v737 = vunpack.c.l.b16 %v157
  %v738 = vunpack.c.l.b16 %v158
  %v739 = vunpack.c.l.b16 %v159
  %v740 = vunpack.c.l.b16 %v160
  %v741 = vunpack.c.l.b16 %v161
  %v742 = vunpack.c.l.b16 %v162
  %v743 = vunpack.c.l.b16 %v163
  %v744 = vunpack.c.l.b16 %v164
  %v745 = vunpack.c.l.b16 %v165
  %v746 = vunpack.c.l.b16 %v166
  %v747 = vunpack.c.l.b16 %v167
  %v748 = vunpack.c.l.b16 %v168
  %v749 = vunpack.c.l.b16 %v169
  %v750 = vunpack.c.l.b16 %v170
  %v751 = vunpack.c.l.b16 %v171
  %v752 = vunpack.c.l.b16 %v172
  %v753 = vunpack.c.l.b16 %v173
  %v754 = vunpack.c.l.b16 %v174
  %v755 = vunpack.c.l.b16 %v175
  %v756 = vunpack.c.l.b16 %v176
  %v757 = vunpack.c.l.b16 %v177
  %v758 = vunpack.c.l.b16 %v178
  %v759 = vunpack.c.l.b16 %v179
  %v760 = vunpack.c.l.b16 %v180
  %v761 = vunpack.c.l.b16 %v181
  %v762 = vunpack.c.l.b16 %v182
  %v763 = vunpack.c.l.b16 %v183
  %v764 = vunpack.c.l.b16 %v184
  %v765 = vunpack.c.l.b16 %v185
  %v766 = vunpack.c.l.b16 %v186
  %v767 = vunpack.c.l.b16 %v187
  %v768 = vunpack.c.l.b16 %v188
  %v769 = vunpack.c.l.b16 %v189
  %v770 = vunpack.c.l.b16 %v190
  %v771 = vunpack.c.l.b16 %v191
  %v772 = vunpack.c.l.b16 %v192
  %v773 = vunpack.c.l.b16 %v193
  %v774 = vunpack.c.l.b16 %v194
  %v775 = vunpack.c.l.b16 %v195
  %v776 = vunpack.c.l.b16 %v196
  %v777 = vunpack.c.l.b16 %v197
  %v778 = vunpack.c.l.b16 %v198
  %v779 = vunpack.c.l.b16 %v199
  %v780 = vunpack.c.l.b16 %v200
  %v781 = vunpack.c.l.b16 %v201
  %v782 = vunpack.c.l.b16 %v202
  %v783 = vunpack.c.l.b16 %v203
  %v784 = vunpack.c.l.b16 %v204
  %v785 = vunpack.c.l.b16 %v205
  %v786 = vunpack.c.l.b16 %v206
  %v787 = vunpack.c.l.b16 %v207
  %v788 = vunpack.c.l.b16 %v208
  %v789 = vunpack.c.l.b16 %v209
  %v790 = vunpack.c.l.b16 %v210
  %v791 = vunpack.c.l.b16 %v211
  %v792 = vunpack.c.l.b16 %v212
  %v793 = vunpack.c.l.b16 %v213
  %v794 = vunpack.c.l.b16 %v214
  %v795 = vpack.c.b16 %v668, %v667
  %v796 = vpack.c.b16 %v670, %v669
  %v797 = vpack.c.b16 %v672, %v671
  %v798 = vpack.c.b16 %v674, %v673
  %v799 = vpack.c.b16 %v676, %v675
  %v800 = vpack.c.b16 %v678, %v677
  %v801 = vpack.c.b16 %v680, %v679
  %v802 = vpack.c.b16 %v682, %v681
  %v803 = vpack.c.b16 %v684, %v683
  %v804 = vpack.c.b16 %v686, %v685
  %v805 = vpack.c.b16 %v688, %v687
  %v806 = vpack.c.b16 %v690, %v689
  %v807 = vpack.c.b16 %v692, %v691
  %v808 = vpack.c.b16 %v694, %v693
  %v809 = vpack.c.b16 %v696, %v695
  %v810 = vpack.c.b16 %v698, %v697
  %v811 = vpack.c.b16 %v700, %v699
  %v812 = vpack.c.b16 %v702, %v701
  %v813 = vpack.c.b16 %v704, %v703
  %v814 = vpack.c.b16 %v706, %v705
  %v815 = vpack.c.b16 %v708, %v707
  %v816 = vpack.c.b16 %v710, %v709
  %v817 = vpack.c.b16 %v712, %v711
  %v818 = vpack.c.b16 %v714, %v713
  %v819 = vpack.c.b16 %v716, %v715
  %v820 = vpack.c.b16 %v718, %v717
  %v821 = vpack.c.b16 %v720, %v719
  %v822 = vpack.c.b16 %v722, %v721
  %v823 = vpack.c.b16 %v724, %v723
  %v824 = vpack.c.b16 %v726, %v725
  %v825 = vpack.c.b16 %v728, %v727
  %v826 = vpack.c.b16 %v730, %v729
  %v827 = vpack.c.b16 %v732, %v731
  %v828 = vpack.c.b16 %v734, %v733
  %v829 = vpack.c.b16 %v736, %v735
  %v830 = vpack.c.b16 %v738, %v737
  %v831 = vpack.c.b16 %v740, %v739
  %v832 = vpack.c.b16 %v742, %v741
  %v833 = vpack.c.b16 %v744, %v743
  %v834 = vpack.c.b16 %v746, %v745
  %v835 = vpack.c.b16 %v748, %v747
  %v836 = vpack.c.b16 %v750, %v749
  %v837 = vpack.c.b16 %v752, %v751
  %v838 = vpack.c.b16 %v754, %v753
  %v839 = vpack.c.b16 %v756, %v755
  %v840 = vpack.c.b16 %v758, %v757
  %v841 = vpack.c.b16 %v760, %v759
  %v842 = vpack.c.b16 %v762, %v761
  %v843 = vpack.c.b16 %v764, %v763
  %v844 = vpack.c.b16 %v766, %v765
  %v845 = vpack.c.b16 %v768, %v767
  %v846 = vpack.c.b16 %v770, %v769
  %v847 = vpack.c.b16 %v772, %v771
  %v848 = vpack.c.b16 %v774, %v773
  %v849 = vpack.c.b16 %v776, %v775
  %v850 = vpack.c.b16 %v778, %v777
  %v851 = vpack.c.b16 %v780, %v779
  %v852 = vpack.c.b16 %v782, %v781
  %v853 = vpack.c.b16 %v784, %v783
  %v854 = vpack.c.b16 %v786, %v785
  %v855 = vpack.c.b16 %v788, %v787
  %v856 = vpack.c.b16 %v790, %v789
  %v857 = vpack.c.b16 %v792, %v791
  %v858 = vpack.c.b16 %v794, %v793
  %923 = vmatpush.bf16.msra.mxu0 %v802
  %924 = vmatpush.bf16.msra.mxu0 %v801
  %925 = vmatpush.bf16.msra.mxu0 %v800
  %926 = vmatpush.bf16.msra.mxu0 %v799
  %927 = vmatpush.bf16.msra.mxu0 %v798
  %928 = vmatpush.bf16.msra.mxu0 %v797
  %929 = vmatpush.bf16.msra.mxu0 %v796
  %930 = vmatpush.bf16.msra.mxu0 %v795
  %931 = vmatmul.bf16.gmra.mxu0 %v411
  %v932 = vpop.f32.mrf.mxu0
  %v933 = vadd.f32 %v217, %v932
  %v934 = vpop.f32.mrf.mxu0
  %v935 = vadd.f32 %v217, %v934
  %936 = vmatmul.bf16.gmra.mxu0 %v419
  %v937 = vpop.f32.mrf.mxu0
  %v938 = vadd.f32 %v217, %v937
  %v939 = vpop.f32.mrf.mxu0
  %v940 = vadd.f32 %v217, %v939
  %941 = vmatmul.bf16.gmra.mxu0 %v427
  %v942 = vpop.f32.mrf.mxu0
  %v943 = vadd.f32 %v217, %v942
  %v944 = vpop.f32.mrf.mxu0
  %v945 = vadd.f32 %v217, %v944
  %946 = vmatmul.bf16.gmra.mxu0 %v435
  %v947 = vpop.f32.mrf.mxu0
  %v948 = vadd.f32 %v217, %v947
  %v949 = vpop.f32.mrf.mxu0
  %v950 = vadd.f32 %v217, %v949
  %951 = vmatmul.bf16.gmra.mxu0 %v443
  %v952 = vpop.f32.mrf.mxu0
  %v953 = vadd.f32 %v217, %v952
  %v954 = vpop.f32.mrf.mxu0
  %v955 = vadd.f32 %v217, %v954
  %956 = vmatmul.bf16.gmra.mxu0 %v451
  %v957 = vpop.f32.mrf.mxu0
  %v958 = vadd.f32 %v217, %v957
  %v959 = vpop.f32.mrf.mxu0
  %v960 = vadd.f32 %v217, %v959
  %961 = vmatmul.bf16.gmra.mxu0 %v459
  %v962 = vpop.f32.mrf.mxu0
  %v963 = vadd.f32 %v217, %v962
  %v964 = vpop.f32.mrf.mxu0
  %v965 = vadd.f32 %v217, %v964
  %966 = vmatmul.bf16.gmra.mxu0 %v467
  %v967 = vpop.f32.mrf.mxu0
  %v968 = vadd.f32 %v217, %v967
  %v969 = vpop.f32.mrf.mxu0
  %v970 = vadd.f32 %v217, %v969
  %971 = vdwg.mxu0
  %972 = vmatpush.bf16.msra.mxu0 %v810
  %973 = vmatpush.bf16.msra.mxu0 %v809
  %974 = vmatpush.bf16.msra.mxu0 %v808
  %975 = vmatpush.bf16.msra.mxu0 %v807
  %976 = vmatpush.bf16.msra.mxu0 %v806
  %977 = vmatpush.bf16.msra.mxu0 %v805
  %978 = vmatpush.bf16.msra.mxu0 %v804
  %979 = vmatpush.bf16.msra.mxu0 %v803
  %980 = vmatmul.bf16.gmra.mxu0 %v412
  %v981 = vpop.f32.mrf.mxu0
  %v982 = vadd.f32 %v933, %v981
  %v983 = vpop.f32.mrf.mxu0
  %v984 = vadd.f32 %v935, %v983
  %985 = vmatmul.bf16.gmra.mxu0 %v420
  %v986 = vpop.f32.mrf.mxu0
  %v987 = vadd.f32 %v938, %v986
  %v988 = vpop.f32.mrf.mxu0
  %v989 = vadd.f32 %v940, %v988
  %990 = vmatmul.bf16.gmra.mxu0 %v428
  %v991 = vpop.f32.mrf.mxu0
  %v992 = vadd.f32 %v943, %v991
  %v993 = vpop.f32.mrf.mxu0
  %v994 = vadd.f32 %v945, %v993
  %995 = vmatmul.bf16.gmra.mxu0 %v436
  %v996 = vpop.f32.mrf.mxu0
  %v997 = vadd.f32 %v948, %v996
  %v998 = vpop.f32.mrf.mxu0
  %v999 = vadd.f32 %v950, %v998
  %1000 = vmatmul.bf16.gmra.mxu0 %v444
  %v1001 = vpop.f32.mrf.mxu0
  %v1002 = vadd.f32 %v953, %v1001
  %v1003 = vpop.f32.mrf.mxu0
  %v1004 = vadd.f32 %v955, %v1003
  %1005 = vmatmul.bf16.gmra.mxu0 %v452
  %v1006 = vpop.f32.mrf.mxu0
  %v1007 = vadd.f32 %v958, %v1006
  %v1008 = vpop.f32.mrf.mxu0
  %v1009 = vadd.f32 %v960, %v1008
  %1010 = vmatmul.bf16.gmra.mxu0 %v460
  %v1011 = vpop.f32.mrf.mxu0
  %v1012 = vadd.f32 %v963, %v1011
  %v1013 = vpop.f32.mrf.mxu0
  %v1014 = vadd.f32 %v965, %v1013
  %1015 = vmatmul.bf16.gmra.mxu0 %v468
  %v1016 = vpop.f32.mrf.mxu0
  %v1017 = vadd.f32 %v968, %v1016
  %v1018 = vpop.f32.mrf.mxu0
  %v1019 = vadd.f32 %v970, %v1018
  %1020 = vdwg.mxu0
  %1021 = vmatpush.bf16.msra.mxu0 %v818
  %1022 = vmatpush.bf16.msra.mxu0 %v817
  %1023 = vmatpush.bf16.msra.mxu0 %v816
  %1024 = vmatpush.bf16.msra.mxu0 %v815
  %1025 = vmatpush.bf16.msra.mxu0 %v814
  %1026 = vmatpush.bf16.msra.mxu0 %v813
  %1027 = vmatpush.bf16.msra.mxu0 %v812
  %1028 = vmatpush.bf16.msra.mxu0 %v811
  %1029 = vmatmul.bf16.gmra.mxu0 %v413
  %v1030 = vpop.f32.mrf.mxu0
  %v1031 = vadd.f32 %v982, %v1030
  %v1032 = vpop.f32.mrf.mxu0
  %v1033 = vadd.f32 %v984, %v1032
  %1034 = vmatmul.bf16.gmra.mxu0 %v421
  %v1035 = vpop.f32.mrf.mxu0
  %v1036 = vadd.f32 %v987, %v1035
  %v1037 = vpop.f32.mrf.mxu0
  %v1038 = vadd.f32 %v989, %v1037
  %1039 = vmatmul.bf16.gmra.mxu0 %v429
  %v1040 = vpop.f32.mrf.mxu0
  %v1041 = vadd.f32 %v992, %v1040
  %v1042 = vpop.f32.mrf.mxu0
  %v1043 = vadd.f32 %v994, %v1042
  %1044 = vmatmul.bf16.gmra.mxu0 %v437
  %v1045 = vpop.f32.mrf.mxu0
  %v1046 = vadd.f32 %v997, %v1045
  %v1047 = vpop.f32.mrf.mxu0
  %v1048 = vadd.f32 %v999, %v1047
  %1049 = vmatmul.bf16.gmra.mxu0 %v445
  %v1050 = vpop.f32.mrf.mxu0
  %v1051 = vadd.f32 %v1002, %v1050
  %v1052 = vpop.f32.mrf.mxu0
  %v1053 = vadd.f32 %v1004, %v1052
  %1054 = vmatmul.bf16.gmra.mxu0 %v453
  %v1055 = vpop.f32.mrf.mxu0
  %v1056 = vadd.f32 %v1007, %v1055
  %v1057 = vpop.f32.mrf.mxu0
  %v1058 = vadd.f32 %v1009, %v1057
  %1059 = vmatmul.bf16.gmra.mxu0 %v461
  %v1060 = vpop.f32.mrf.mxu0
  %v1061 = vadd.f32 %v1012, %v1060
  %v1062 = vpop.f32.mrf.mxu0
  %v1063 = vadd.f32 %v1014, %v1062
  %1064 = vmatmul.bf16.gmra.mxu0 %v469
  %v1065 = vpop.f32.mrf.mxu0
  %v1066 = vadd.f32 %v1017, %v1065
  %v1067 = vpop.f32.mrf.mxu0
  %v1068 = vadd.f32 %v1019, %v1067
  %1069 = vdwg.mxu0
  %1070 = vmatpush.bf16.msra.mxu0 %v826
  %1071 = vmatpush.bf16.msra.mxu0 %v825
  %1072 = vmatpush.bf16.msra.mxu0 %v824
  %1073 = vmatpush.bf16.msra.mxu0 %v823
  %1074 = vmatpush.bf16.msra.mxu0 %v822
  %1075 = vmatpush.bf16.msra.mxu0 %v821
  %1076 = vmatpush.bf16.msra.mxu0 %v820
  %1077 = vmatpush.bf16.msra.mxu0 %v819
  %1078 = vmatmul.bf16.gmra.mxu0 %v414
  %v1079 = vpop.f32.mrf.mxu0
  %v1080 = vadd.f32 %v1031, %v1079
  %v1081 = vpop.f32.mrf.mxu0
  %v1082 = vadd.f32 %v1033, %v1081
  %1083 = vmatmul.bf16.gmra.mxu0 %v422
  %v1084 = vpop.f32.mrf.mxu0
  %v1085 = vadd.f32 %v1036, %v1084
  %v1086 = vpop.f32.mrf.mxu0
  %v1087 = vadd.f32 %v1038, %v1086
  %1088 = vmatmul.bf16.gmra.mxu0 %v430
  %v1089 = vpop.f32.mrf.mxu0
  %v1090 = vadd.f32 %v1041, %v1089
  %v1091 = vpop.f32.mrf.mxu0
  %v1092 = vadd.f32 %v1043, %v1091
  %1093 = vmatmul.bf16.gmra.mxu0 %v438
  %v1094 = vpop.f32.mrf.mxu0
  %v1095 = vadd.f32 %v1046, %v1094
  %v1096 = vpop.f32.mrf.mxu0
  %v1097 = vadd.f32 %v1048, %v1096
  %1098 = vmatmul.bf16.gmra.mxu0 %v446
  %v1099 = vpop.f32.mrf.mxu0
  %v1100 = vadd.f32 %v1051, %v1099
  %v1101 = vpop.f32.mrf.mxu0
  %v1102 = vadd.f32 %v1053, %v1101
  %1103 = vmatmul.bf16.gmra.mxu0 %v454
  %v1104 = vpop.f32.mrf.mxu0
  %v1105 = vadd.f32 %v1056, %v1104
  %v1106 = vpop.f32.mrf.mxu0
  %v1107 = vadd.f32 %v1058, %v1106
  %1108 = vmatmul.bf16.gmra.mxu0 %v462
  %v1109 = vpop.f32.mrf.mxu0
  %v1110 = vadd.f32 %v1061, %v1109
  %v1111 = vpop.f32.mrf.mxu0
  %v1112 = vadd.f32 %v1063, %v1111
  %1113 = vmatmul.bf16.gmra.mxu0 %v470
  %v1114 = vpop.f32.mrf.mxu0
  %v1115 = vadd.f32 %v1066, %v1114
  %v1116 = vpop.f32.mrf.mxu0
  %v1117 = vadd.f32 %v1068, %v1116
  %1118 = vdwg.mxu0
  %1119 = vmatpush.bf16.msra.mxu0 %v834
  %1120 = vmatpush.bf16.msra.mxu0 %v833
  %1121 = vmatpush.bf16.msra.mxu0 %v832
  %1122 = vmatpush.bf16.msra.mxu0 %v831
  %1123 = vmatpush.bf16.msra.mxu0 %v830
  %1124 = vmatpush.bf16.msra.mxu0 %v829
  %1125 = vmatpush.bf16.msra.mxu0 %v828
  %1126 = vmatpush.bf16.msra.mxu0 %v827
  %1127 = vmatmul.bf16.gmra.mxu0 %v415
  %v1128 = vpop.f32.mrf.mxu0
  %v1129 = vadd.f32 %v1080, %v1128
  %v1130 = vpop.f32.mrf.mxu0
  %v1131 = vadd.f32 %v1082, %v1130
  %1132 = vmatmul.bf16.gmra.mxu0 %v423
  %v1133 = vpop.f32.mrf.mxu0
  %v1134 = vadd.f32 %v1085, %v1133
  %v1135 = vpop.f32.mrf.mxu0
  %v1136 = vadd.f32 %v1087, %v1135
  %1137 = vmatmul.bf16.gmra.mxu0 %v431
  %v1138 = vpop.f32.mrf.mxu0
  %v1139 = vadd.f32 %v1090, %v1138
  %v1140 = vpop.f32.mrf.mxu0
  %v1141 = vadd.f32 %v1092, %v1140
  %1142 = vmatmul.bf16.gmra.mxu0 %v439
  %v1143 = vpop.f32.mrf.mxu0
  %v1144 = vadd.f32 %v1095, %v1143
  %v1145 = vpop.f32.mrf.mxu0
  %v1146 = vadd.f32 %v1097, %v1145
  %1147 = vmatmul.bf16.gmra.mxu0 %v447
  %v1148 = vpop.f32.mrf.mxu0
  %v1149 = vadd.f32 %v1100, %v1148
  %v1150 = vpop.f32.mrf.mxu0
  %v1151 = vadd.f32 %v1102, %v1150
  %1152 = vmatmul.bf16.gmra.mxu0 %v455
  %v1153 = vpop.f32.mrf.mxu0
  %v1154 = vadd.f32 %v1105, %v1153
  %v1155 = vpop.f32.mrf.mxu0
  %v1156 = vadd.f32 %v1107, %v1155
  %1157 = vmatmul.bf16.gmra.mxu0 %v463
  %v1158 = vpop.f32.mrf.mxu0
  %v1159 = vadd.f32 %v1110, %v1158
  %v1160 = vpop.f32.mrf.mxu0
  %v1161 = vadd.f32 %v1112, %v1160
  %1162 = vmatmul.bf16.gmra.mxu0 %v471
  %v1163 = vpop.f32.mrf.mxu0
  %v1164 = vadd.f32 %v1115, %v1163
  %v1165 = vpop.f32.mrf.mxu0
  %v1166 = vadd.f32 %v1117, %v1165
  %1167 = vdwg.mxu0
  %1168 = vmatpush.bf16.msra.mxu0 %v842
  %1169 = vmatpush.bf16.msra.mxu0 %v841
  %1170 = vmatpush.bf16.msra.mxu0 %v840
  %1171 = vmatpush.bf16.msra.mxu0 %v839
  %1172 = vmatpush.bf16.msra.mxu0 %v838
  %1173 = vmatpush.bf16.msra.mxu0 %v837
  %1174 = vmatpush.bf16.msra.mxu0 %v836
  %1175 = vmatpush.bf16.msra.mxu0 %v835
  %1176 = vmatmul.bf16.gmra.mxu0 %v416
  %v1177 = vpop.f32.mrf.mxu0
  %v1178 = vadd.f32 %v1129, %v1177
  %v1179 = vpop.f32.mrf.mxu0
  %v1180 = vadd.f32 %v1131, %v1179
  %1181 = vmatmul.bf16.gmra.mxu0 %v424
  %v1182 = vpop.f32.mrf.mxu0
  %v1183 = vadd.f32 %v1134, %v1182
  %v1184 = vpop.f32.mrf.mxu0
  %v1185 = vadd.f32 %v1136, %v1184
  %1186 = vmatmul.bf16.gmra.mxu0 %v432
  %v1187 = vpop.f32.mrf.mxu0
  %v1188 = vadd.f32 %v1139, %v1187
  %v1189 = vpop.f32.mrf.mxu0
  %v1190 = vadd.f32 %v1141, %v1189
  %1191 = vmatmul.bf16.gmra.mxu0 %v440
  %v1192 = vpop.f32.mrf.mxu0
  %v1193 = vadd.f32 %v1144, %v1192
  %v1194 = vpop.f32.mrf.mxu0
  %v1195 = vadd.f32 %v1146, %v1194
  %1196 = vmatmul.bf16.gmra.mxu0 %v448
  %v1197 = vpop.f32.mrf.mxu0
  %v1198 = vadd.f32 %v1149, %v1197
  %v1199 = vpop.f32.mrf.mxu0
  %v1200 = vadd.f32 %v1151, %v1199
  %1201 = vmatmul.bf16.gmra.mxu0 %v456
  %v1202 = vpop.f32.mrf.mxu0
  %v1203 = vadd.f32 %v1154, %v1202
  %v1204 = vpop.f32.mrf.mxu0
  %v1205 = vadd.f32 %v1156, %v1204
  %1206 = vmatmul.bf16.gmra.mxu0 %v464
  %v1207 = vpop.f32.mrf.mxu0
  %v1208 = vadd.f32 %v1159, %v1207
  %v1209 = vpop.f32.mrf.mxu0
  %v1210 = vadd.f32 %v1161, %v1209
  %1211 = vmatmul.bf16.gmra.mxu0 %v472
  %v1212 = vpop.f32.mrf.mxu0
  %v1213 = vadd.f32 %v1164, %v1212
  %v1214 = vpop.f32.mrf.mxu0
  %v1215 = vadd.f32 %v1166, %v1214
  %1216 = vdwg.mxu0
  %1217 = vmatpush.bf16.msra.mxu0 %v850
  %1218 = vmatpush.bf16.msra.mxu0 %v849
  %1219 = vmatpush.bf16.msra.mxu0 %v848
  %1220 = vmatpush.bf16.msra.mxu0 %v847
  %1221 = vmatpush.bf16.msra.mxu0 %v846
  %1222 = vmatpush.bf16.msra.mxu0 %v845
  %1223 = vmatpush.bf16.msra.mxu0 %v844
  %1224 = vmatpush.bf16.msra.mxu0 %v843
  %1225 = vmatmul.bf16.gmra.mxu0 %v417
  %v1226 = vpop.f32.mrf.mxu0
  %v1227 = vadd.f32 %v1178, %v1226
  %v1228 = vpop.f32.mrf.mxu0
  %v1229 = vadd.f32 %v1180, %v1228
  %1230 = vmatmul.bf16.gmra.mxu0 %v425
  %v1231 = vpop.f32.mrf.mxu0
  %v1232 = vadd.f32 %v1183, %v1231
  %v1233 = vpop.f32.mrf.mxu0
  %v1234 = vadd.f32 %v1185, %v1233
  %1235 = vmatmul.bf16.gmra.mxu0 %v433
  %v1236 = vpop.f32.mrf.mxu0
  %v1237 = vadd.f32 %v1188, %v1236
  %v1238 = vpop.f32.mrf.mxu0
  %v1239 = vadd.f32 %v1190, %v1238
  %1240 = vmatmul.bf16.gmra.mxu0 %v441
  %v1241 = vpop.f32.mrf.mxu0
  %v1242 = vadd.f32 %v1193, %v1241
  %v1243 = vpop.f32.mrf.mxu0
  %v1244 = vadd.f32 %v1195, %v1243
  %1245 = vmatmul.bf16.gmra.mxu0 %v449
  %v1246 = vpop.f32.mrf.mxu0
  %v1247 = vadd.f32 %v1198, %v1246
  %v1248 = vpop.f32.mrf.mxu0
  %v1249 = vadd.f32 %v1200, %v1248
  %1250 = vmatmul.bf16.gmra.mxu0 %v457
  %v1251 = vpop.f32.mrf.mxu0
  %v1252 = vadd.f32 %v1203, %v1251
  %v1253 = vpop.f32.mrf.mxu0
  %v1254 = vadd.f32 %v1205, %v1253
  %1255 = vmatmul.bf16.gmra.mxu0 %v465
  %v1256 = vpop.f32.mrf.mxu0
  %v1257 = vadd.f32 %v1208, %v1256
  %v1258 = vpop.f32.mrf.mxu0
  %v1259 = vadd.f32 %v1210, %v1258
  %1260 = vmatmul.bf16.gmra.mxu0 %v473
  %v1261 = vpop.f32.mrf.mxu0
  %v1262 = vadd.f32 %v1213, %v1261
  %v1263 = vpop.f32.mrf.mxu0
  %v1264 = vadd.f32 %v1215, %v1263
  %1265 = vdwg.mxu0
  %1266 = vmatpush.bf16.msra.mxu0 %v858
  %1267 = vmatpush.bf16.msra.mxu0 %v857
  %1268 = vmatpush.bf16.msra.mxu0 %v856
  %1269 = vmatpush.bf16.msra.mxu0 %v855
  %1270 = vmatpush.bf16.msra.mxu0 %v854
  %1271 = vmatpush.bf16.msra.mxu0 %v853
  %1272 = vmatpush.bf16.msra.mxu0 %v852
  %1273 = vmatpush.bf16.msra.mxu0 %v851
  %1274 = vmatmul.bf16.gmra.mxu0 %v418
  %v1275 = vpop.f32.mrf.mxu0
  %v1276 = vadd.f32 %v1227, %v1275
  %v1277 = vpop.f32.mrf.mxu0
  %v1278 = vadd.f32 %v1229, %v1277
  %1279 = vmatmul.bf16.gmra.mxu0 %v426
  %v1280 = vpop.f32.mrf.mxu0
  %v1281 = vadd.f32 %v1232, %v1280
  %v1282 = vpop.f32.mrf.mxu0
  %v1283 = vadd.f32 %v1234, %v1282
  %1284 = vmatmul.bf16.gmra.mxu0 %v434
  %v1285 = vpop.f32.mrf.mxu0
  %v1286 = vadd.f32 %v1237, %v1285
  %v1287 = vpop.f32.mrf.mxu0
  %v1288 = vadd.f32 %v1239, %v1287
  %1289 = vmatmul.bf16.gmra.mxu0 %v442
  %v1290 = vpop.f32.mrf.mxu0
  %v1291 = vadd.f32 %v1242, %v1290
  %v1292 = vpop.f32.mrf.mxu0
  %v1293 = vadd.f32 %v1244, %v1292
  %1294 = vmatmul.bf16.gmra.mxu0 %v450
  %v1295 = vpop.f32.mrf.mxu0
  %v1296 = vadd.f32 %v1247, %v1295
  %v1297 = vpop.f32.mrf.mxu0
  %v1298 = vadd.f32 %v1249, %v1297
  %1299 = vmatmul.bf16.gmra.mxu0 %v458
  %v1300 = vpop.f32.mrf.mxu0
  %v1301 = vadd.f32 %v1252, %v1300
  %v1302 = vpop.f32.mrf.mxu0
  %v1303 = vadd.f32 %v1254, %v1302
  %1304 = vmatmul.bf16.gmra.mxu0 %v466
  %v1305 = vpop.f32.mrf.mxu0
  %v1306 = vadd.f32 %v1257, %v1305
  %v1307 = vpop.f32.mrf.mxu0
  %v1308 = vadd.f32 %v1259, %v1307
  %1309 = vmatmul.bf16.gmra.mxu0 %v474
  %v1310 = vpop.f32.mrf.mxu0
  %v1311 = vadd.f32 %v1262, %v1310
  %v1312 = vpop.f32.mrf.mxu0
  %v1313 = vadd.f32 %v1264, %v1312
  %1314 = vdwg.mxu0
  %v1315 = vmax.f32 %v1276, 0.0
  %v1316 = vmax.f32 %v1278, 0.0
  %v1317 = vmax.f32 %v1281, 0.0
  %v1318 = vmax.f32 %v1283, 0.0
  %v1319 = vmax.f32 %v1286, 0.0
  %v1320 = vmax.f32 %v1288, 0.0
  %v1321 = vmax.f32 %v1291, 0.0
  %v1322 = vmax.f32 %v1293, 0.0
  %v1323 = vmax.f32 %v1296, 0.0
  %v1324 = vmax.f32 %v1298, 0.0
  %v1325 = vmax.f32 %v1301, 0.0
  %v1326 = vmax.f32 %v1303, 0.0
  %v1327 = vmax.f32 %v1306, 0.0
  %v1328 = vmax.f32 %v1308, 0.0
  %v1329 = vmax.f32 %v1311, 0.0
  %v1330 = vmax.f32 %v1313, 0.0
  %v1331 = vpack.c.bf16 %v1316, %v1315
  %v1332 = vpack.c.bf16 %v1318, %v1317
  %v1333 = vpack.c.bf16 %v1320, %v1319
  %v1334 = vpack.c.bf16 %v1322, %v1321
  %v1335 = vpack.c.bf16 %v1324, %v1323
  %v1336 = vpack.c.bf16 %v1326, %v1325
  %v1337 = vpack.c.bf16 %v1328, %v1327
  %v1338 = vpack.c.bf16 %v1330, %v1329
  %v1339 = vld [vmem:[%s4] sm:$0xf]
  %v1340 = vld [vmem:[%s4 + $0x4] sm:$0xf]
  %v1341 = vld [vmem:[%s4 + $0x8] sm:$0xf]
  %v1342 = vld [vmem:[%s4 + $0xc] sm:$0xf]
  %v1343 = vld [vmem:[%s4 + $0x10] sm:$0xf]
  %v1344 = vld [vmem:[%s4 + $0x14] sm:$0xf]
  %v1345 = vld [vmem:[%s4 + $0x18] sm:$0xf]
  %v1346 = vld [vmem:[%s4 + $0x1c] sm:$0xf]
  %v1347 = vld [vmem:[%s4 + $0x20] sm:$0xf]
  %v1348 = vld [vmem:[%s4 + $0x24] sm:$0xf]
  %v1349 = vld [vmem:[%s4 + $0x28] sm:$0xf]
  %v1350 = vld [vmem:[%s4 + $0x2c] sm:$0xf]
  %v1351 = vld [vmem:[%s4 + $0x30] sm:$0xf]
  %v1352 = vld [vmem:[%s4 + $0x34] sm:$0xf]
  %v1353 = vld [vmem:[%s4 + $0x38] sm:$0xf]
  %v1354 = vld [vmem:[%s4 + $0x3c] sm:$0xf]
  %v1355 = vld [vmem:[%s5] sm:$0x1]
  %v1357 = vperm.slane %v1355, 0
  %v1375 = vunpack.c.l.b16 %v1339
  %v1376 = vunpack.c.l.b16 %v1340
  %v1377 = vunpack.c.l.b16 %v1341
  %v1378 = vunpack.c.l.b16 %v1342
  %v1379 = vunpack.c.l.b16 %v1343
  %v1380 = vunpack.c.l.b16 %v1344
  %v1381 = vunpack.c.l.b16 %v1345
  %v1382 = vunpack.c.l.b16 %v1346
  %v1383 = vunpack.c.l.b16 %v1347
  %v1384 = vunpack.c.l.b16 %v1348
  %v1385 = vunpack.c.l.b16 %v1349
  %v1386 = vunpack.c.l.b16 %v1350
  %v1387 = vunpack.c.l.b16 %v1351
  %v1388 = vunpack.c.l.b16 %v1352
  %v1389 = vunpack.c.l.b16 %v1353
  %v1390 = vunpack.c.l.b16 %v1354
  %v1391 = vpack.c.b16 %v1376, %v1375
  %v1392 = vpack.c.b16 %v1378, %v1377
  %v1393 = vpack.c.b16 %v1380, %v1379
  %v1394 = vpack.c.b16 %v1382, %v1381
  %v1395 = vpack.c.b16 %v1384, %v1383
  %v1396 = vpack.c.b16 %v1386, %v1385
  %v1397 = vpack.c.b16 %v1388, %v1387
  %v1398 = vpack.c.b16 %v1390, %v1389
  %1407 = vmatpush.bf16.msra.mxu0 %v1398
  %1408 = vmatpush.bf16.msra.mxu0 %v1397
  %1409 = vmatpush.bf16.msra.mxu0 %v1396
  %1410 = vmatpush.bf16.msra.mxu0 %v1395
  %1411 = vmatpush.bf16.msra.mxu0 %v1394
  %1412 = vmatpush.bf16.msra.mxu0 %v1393
  %1413 = vmatpush.bf16.msra.mxu0 %v1392
  %1414 = vmatpush.bf16.msra.mxu0 %v1391
  %1415 = vmatmul.bf16.gmra.mxu0 %v1331
  %v1416 = vpop.f32.mrf.mxu0
  %v1417 = vadd.f32 %v1357, %v1416
  %v1418 = vpop.f32.mrf.mxu0
  %v1419 = vadd.f32 %v1357, %v1418
  %1420 = vmatmul.bf16.gmra.mxu0 %v1332
  %v1421 = vpop.f32.mrf.mxu0
  %v1422 = vadd.f32 %v1357, %v1421
  %v1423 = vpop.f32.mrf.mxu0
  %v1424 = vadd.f32 %v1357, %v1423
  %1425 = vmatmul.bf16.gmra.mxu0 %v1333
  %v1426 = vpop.f32.mrf.mxu0
  %v1427 = vadd.f32 %v1357, %v1426
  %v1428 = vpop.f32.mrf.mxu0
  %v1429 = vadd.f32 %v1357, %v1428
  %1430 = vmatmul.bf16.gmra.mxu0 %v1334
  %v1431 = vpop.f32.mrf.mxu0
  %v1432 = vadd.f32 %v1357, %v1431
  %v1433 = vpop.f32.mrf.mxu0
  %v1434 = vadd.f32 %v1357, %v1433
  %1435 = vmatmul.bf16.gmra.mxu0 %v1335
  %v1436 = vpop.f32.mrf.mxu0
  %v1437 = vadd.f32 %v1357, %v1436
  %v1438 = vpop.f32.mrf.mxu0
  %v1439 = vadd.f32 %v1357, %v1438
  %1440 = vmatmul.bf16.gmra.mxu0 %v1336
  %v1441 = vpop.f32.mrf.mxu0
  %v1442 = vadd.f32 %v1357, %v1441
  %v1443 = vpop.f32.mrf.mxu0
  %v1444 = vadd.f32 %v1357, %v1443
  %1445 = vmatmul.bf16.gmra.mxu0 %v1337
  %v1446 = vpop.f32.mrf.mxu0
  %v1447 = vadd.f32 %v1357, %v1446
  %v1448 = vpop.f32.mrf.mxu0
  %v1449 = vadd.f32 %v1357, %v1448
  %1450 = vmatmul.bf16.gmra.mxu0 %v1338
  %v1451 = vpop.f32.mrf.mxu0
  %v1452 = vadd.f32 %v1357, %v1451
  %v1453 = vpop.f32.mrf.mxu0
  %v1454 = vadd.f32 %v1357, %v1453
  %1455 = vdwg.mxu0
  %vm1456 = vcmask 80896
  %v1457 = vsel %vm1456, %v1417, -inf
  %1458 = vmax.xlane.f32.xlu0 %v1457
  %v1459 = vpop.xlane.xlu0 %1458
  %v1460 = vsel %vm1456, %v1419, -inf
  %1461 = vmax.xlane.f32.xlu0 %v1460
  %v1462 = vpop.xlane.xlu0 %1461
  %v1463 = vsel %vm1456, %v1422, -inf
  %1464 = vmax.xlane.f32.xlu0 %v1463
  %v1465 = vpop.xlane.xlu0 %1464
  %v1466 = vsel %vm1456, %v1424, -inf
  %1467 = vmax.xlane.f32.xlu0 %v1466
  %v1468 = vpop.xlane.xlu0 %1467
  %v1469 = vsel %vm1456, %v1427, -inf
  %1470 = vmax.xlane.f32.xlu0 %v1469
  %v1471 = vpop.xlane.xlu0 %1470
  %v1472 = vsel %vm1456, %v1429, -inf
  %1473 = vmax.xlane.f32.xlu0 %v1472
  %v1474 = vpop.xlane.xlu0 %1473
  %v1475 = vsel %vm1456, %v1432, -inf
  %1476 = vmax.xlane.f32.xlu0 %v1475
  %v1477 = vpop.xlane.xlu0 %1476
  %v1478 = vsel %vm1456, %v1434, -inf
  %1479 = vmax.xlane.f32.xlu0 %v1478
  %v1480 = vpop.xlane.xlu0 %1479
  %v1481 = vsel %vm1456, %v1437, -inf
  %1482 = vmax.xlane.f32.xlu0 %v1481
  %v1483 = vpop.xlane.xlu0 %1482
  %v1484 = vsel %vm1456, %v1439, -inf
  %1485 = vmax.xlane.f32.xlu0 %v1484
  %v1486 = vpop.xlane.xlu0 %1485
  %v1487 = vsel %vm1456, %v1442, -inf
  %1488 = vmax.xlane.f32.xlu0 %v1487
  %v1489 = vpop.xlane.xlu0 %1488
  %v1490 = vsel %vm1456, %v1444, -inf
  %1491 = vmax.xlane.f32.xlu0 %v1490
  %v1492 = vpop.xlane.xlu0 %1491
  %v1493 = vsel %vm1456, %v1447, -inf
  %1494 = vmax.xlane.f32.xlu0 %v1493
  %v1495 = vpop.xlane.xlu0 %1494
  %v1496 = vsel %vm1456, %v1449, -inf
  %1497 = vmax.xlane.f32.xlu0 %v1496
  %v1498 = vpop.xlane.xlu0 %1497
  %v1499 = vsel %vm1456, %v1452, -inf
  %1500 = vmax.xlane.f32.xlu0 %v1499
  %v1501 = vpop.xlane.xlu0 %1500
  %v1502 = vsel %vm1456, %v1454, -inf
  %1503 = vmax.xlane.f32.xlu0 %v1502
  %v1504 = vpop.xlane.xlu0 %1503
  %v1505 = vsub.f32 %v1417, %v1459
  %v1506 = vsub.f32 %v1419, %v1462
  %v1507 = vsub.f32 %v1422, %v1465
  %v1508 = vsub.f32 %v1424, %v1468
  %v1509 = vsub.f32 %v1427, %v1471
  %v1510 = vsub.f32 %v1429, %v1474
  %v1511 = vsub.f32 %v1432, %v1477
  %v1512 = vsub.f32 %v1434, %v1480
  %v1513 = vsub.f32 %v1437, %v1483
  %v1514 = vsub.f32 %v1439, %v1486
  %v1515 = vsub.f32 %v1442, %v1489
  %v1516 = vsub.f32 %v1444, %v1492
  %v1517 = vsub.f32 %v1447, %v1495
  %v1518 = vsub.f32 %v1449, %v1498
  %v1519 = vsub.f32 %v1452, %v1501
  %v1520 = vsub.f32 %v1454, %v1504
  %v1521 = vmul.f32 %v1505, 1.442695
  %v1522 = vpow.pop %v1521
  %v1523 = vmul.f32 %v1506, 1.442695
  %v1524 = vpow.pop %v1523
  %v1525 = vmul.f32 %v1507, 1.442695
  %v1526 = vpow.pop %v1525
  %v1527 = vmul.f32 %v1508, 1.442695
  %v1528 = vpow.pop %v1527
  %v1529 = vmul.f32 %v1509, 1.442695
  %v1530 = vpow.pop %v1529
  %v1531 = vmul.f32 %v1510, 1.442695
  %v1532 = vpow.pop %v1531
  %v1533 = vmul.f32 %v1511, 1.442695
  %v1534 = vpow.pop %v1533
  %v1535 = vmul.f32 %v1512, 1.442695
  %v1536 = vpow.pop %v1535
  %v1537 = vmul.f32 %v1513, 1.442695
  %v1538 = vpow.pop %v1537
  %v1539 = vmul.f32 %v1514, 1.442695
  %v1540 = vpow.pop %v1539
  %v1541 = vmul.f32 %v1515, 1.442695
  %v1542 = vpow.pop %v1541
  %v1543 = vmul.f32 %v1516, 1.442695
  %v1544 = vpow.pop %v1543
  %v1545 = vmul.f32 %v1517, 1.442695
  %v1546 = vpow.pop %v1545
  %v1547 = vmul.f32 %v1518, 1.442695
  %v1548 = vpow.pop %v1547
  %v1549 = vmul.f32 %v1519, 1.442695
  %v1550 = vpow.pop %v1549
  %v1551 = vmul.f32 %v1520, 1.442695
  %v1552 = vpow.pop %v1551
  %v1553 = vsel %vm1456, %v1522, 0.0
  %1554 = vadd.xlane.f32.xlu0 %v1553
  %v1555 = vpop.xlane.xlu0 %1554
  %v1556 = vsel %vm1456, %v1524, 0.0
  %1557 = vadd.xlane.f32.xlu0 %v1556
  %v1558 = vpop.xlane.xlu0 %1557
  %v1559 = vsel %vm1456, %v1526, 0.0
  %1560 = vadd.xlane.f32.xlu0 %v1559
  %v1561 = vpop.xlane.xlu0 %1560
  %v1562 = vsel %vm1456, %v1528, 0.0
  %1563 = vadd.xlane.f32.xlu0 %v1562
  %v1564 = vpop.xlane.xlu0 %1563
  %v1565 = vsel %vm1456, %v1530, 0.0
  %1566 = vadd.xlane.f32.xlu0 %v1565
  %v1567 = vpop.xlane.xlu0 %1566
  %v1568 = vsel %vm1456, %v1532, 0.0
  %1569 = vadd.xlane.f32.xlu0 %v1568
  %v1570 = vpop.xlane.xlu0 %1569
  %v1571 = vsel %vm1456, %v1534, 0.0
  %1572 = vadd.xlane.f32.xlu0 %v1571
  %v1573 = vpop.xlane.xlu0 %1572
  %v1574 = vsel %vm1456, %v1536, 0.0
  %1575 = vadd.xlane.f32.xlu0 %v1574
  %v1576 = vpop.xlane.xlu0 %1575
  %v1577 = vsel %vm1456, %v1538, 0.0
  %1578 = vadd.xlane.f32.xlu0 %v1577
  %v1579 = vpop.xlane.xlu0 %1578
  %v1580 = vsel %vm1456, %v1540, 0.0
  %1581 = vadd.xlane.f32.xlu0 %v1580
  %v1582 = vpop.xlane.xlu0 %1581
  %v1583 = vsel %vm1456, %v1542, 0.0
  %1584 = vadd.xlane.f32.xlu0 %v1583
  %v1585 = vpop.xlane.xlu0 %1584
  %v1586 = vsel %vm1456, %v1544, 0.0
  %1587 = vadd.xlane.f32.xlu0 %v1586
  %v1588 = vpop.xlane.xlu0 %1587
  %v1589 = vsel %vm1456, %v1546, 0.0
  %1590 = vadd.xlane.f32.xlu0 %v1589
  %v1591 = vpop.xlane.xlu0 %1590
  %v1592 = vsel %vm1456, %v1548, 0.0
  %1593 = vadd.xlane.f32.xlu0 %v1592
  %v1594 = vpop.xlane.xlu0 %1593
  %v1595 = vsel %vm1456, %v1550, 0.0
  %1596 = vadd.xlane.f32.xlu0 %v1595
  %v1597 = vpop.xlane.xlu0 %1596
  %v1598 = vsel %vm1456, %v1552, 0.0
  %1599 = vadd.xlane.f32.xlu0 %v1598
  %v1600 = vpop.xlane.xlu0 %1599
  %v1601 = vlog2.pop %v1555
  %v1602 = vmul.f32 %v1601, 0.6931472
  %v1603 = vlog2.pop %v1558
  %v1604 = vmul.f32 %v1603, 0.6931472
  %v1605 = vlog2.pop %v1561
  %v1606 = vmul.f32 %v1605, 0.6931472
  %v1607 = vlog2.pop %v1564
  %v1608 = vmul.f32 %v1607, 0.6931472
  %v1609 = vlog2.pop %v1567
  %v1610 = vmul.f32 %v1609, 0.6931472
  %v1611 = vlog2.pop %v1570
  %v1612 = vmul.f32 %v1611, 0.6931472
  %v1613 = vlog2.pop %v1573
  %v1614 = vmul.f32 %v1613, 0.6931472
  %v1615 = vlog2.pop %v1576
  %v1616 = vmul.f32 %v1615, 0.6931472
  %v1617 = vlog2.pop %v1579
  %v1618 = vmul.f32 %v1617, 0.6931472
  %v1619 = vlog2.pop %v1582
  %v1620 = vmul.f32 %v1619, 0.6931472
  %v1621 = vlog2.pop %v1585
  %v1622 = vmul.f32 %v1621, 0.6931472
  %v1623 = vlog2.pop %v1588
  %v1624 = vmul.f32 %v1623, 0.6931472
  %v1625 = vlog2.pop %v1591
  %v1626 = vmul.f32 %v1625, 0.6931472
  %v1627 = vlog2.pop %v1594
  %v1628 = vmul.f32 %v1627, 0.6931472
  %v1629 = vlog2.pop %v1597
  %v1630 = vmul.f32 %v1629, 0.6931472
  %v1631 = vlog2.pop %v1600
  %v1632 = vmul.f32 %v1631, 0.6931472
  %v1633 = vsub.f32 %v1505, %v1602
  %v1634 = vsub.f32 %v1506, %v1604
  %v1635 = vsub.f32 %v1507, %v1606
  %v1636 = vsub.f32 %v1508, %v1608
  %v1637 = vsub.f32 %v1509, %v1610
  %v1638 = vsub.f32 %v1510, %v1612
  %v1639 = vsub.f32 %v1511, %v1614
  %v1640 = vsub.f32 %v1512, %v1616
  %v1641 = vsub.f32 %v1513, %v1618
  %v1642 = vsub.f32 %v1514, %v1620
  %v1643 = vsub.f32 %v1515, %v1622
  %v1644 = vsub.f32 %v1516, %v1624
  %v1645 = vsub.f32 %v1517, %v1626
  %v1646 = vsub.f32 %v1518, %v1628
  %v1647 = vsub.f32 %v1519, %v1630
  %v1648 = vsub.f32 %v1520, %v1632
  %v1649 = vlaneseq
  %v1650 = vand.u32 %v1649, 127
  %v1651 = vld [vmem:[%s1] sm:$0xff]
  %v1652 = vld [vmem:[%s1 + $0x8] sm:$0xff]
  %v1653 = vld [vmem:[%s1 + $0x10] sm:$0xff]
  %v1654 = vld [vmem:[%s1 + $0x18] sm:$0xff]
  %v1655 = vld [vmem:[%s1 + $0x20] sm:$0xff]
  %v1656 = vld [vmem:[%s1 + $0x28] sm:$0xff]
  %v1657 = vld [vmem:[%s1 + $0x30] sm:$0xff]
  %v1658 = vld [vmem:[%s1 + $0x38] sm:$0xff]
  %v1659 = vld [vmem:[%s1 + $0x40] sm:$0xff]
  %v1660 = vld [vmem:[%s1 + $0x48] sm:$0xff]
  %v1661 = vld [vmem:[%s1 + $0x50] sm:$0xff]
  %v1662 = vld [vmem:[%s1 + $0x58] sm:$0xff]
  %v1663 = vld [vmem:[%s1 + $0x60] sm:$0xff]
  %v1664 = vld [vmem:[%s1 + $0x68] sm:$0xff]
  %v1665 = vld [vmem:[%s1 + $0x70] sm:$0xff]
  %v1666 = vld [vmem:[%s1 + $0x78] sm:$0xff]
  %1667 = vset.pattern.permute.xlu0 0
  %1668 = vperm.xlu0 %1667, %v1651
  %v1669 = vpop.permute.xlu0 %1668
  %1670 = vset.pattern.permute.xlu0 0
  %1671 = vperm.xlu0 %1670, %v1652
  %v1672 = vpop.permute.xlu0 %1671
  %1673 = vset.pattern.permute.xlu0 0
  %1674 = vperm.xlu0 %1673, %v1653
  %v1675 = vpop.permute.xlu0 %1674
  %1676 = vset.pattern.permute.xlu0 0
  %1677 = vperm.xlu0 %1676, %v1654
  %v1678 = vpop.permute.xlu0 %1677
  %1679 = vset.pattern.permute.xlu0 0
  %1680 = vperm.xlu0 %1679, %v1655
  %v1681 = vpop.permute.xlu0 %1680
  %1682 = vset.pattern.permute.xlu0 0
  %1683 = vperm.xlu0 %1682, %v1656
  %v1684 = vpop.permute.xlu0 %1683
  %1685 = vset.pattern.permute.xlu0 0
  %1686 = vperm.xlu0 %1685, %v1657
  %v1687 = vpop.permute.xlu0 %1686
  %1688 = vset.pattern.permute.xlu0 0
  %1689 = vperm.xlu0 %1688, %v1658
  %v1690 = vpop.permute.xlu0 %1689
  %1691 = vset.pattern.permute.xlu0 0
  %1692 = vperm.xlu0 %1691, %v1659
  %v1693 = vpop.permute.xlu0 %1692
  %1694 = vset.pattern.permute.xlu0 0
  %1695 = vperm.xlu0 %1694, %v1660
  %v1696 = vpop.permute.xlu0 %1695
  %1697 = vset.pattern.permute.xlu0 0
  %1698 = vperm.xlu0 %1697, %v1661
  %v1699 = vpop.permute.xlu0 %1698
  %1700 = vset.pattern.permute.xlu0 0
  %1701 = vperm.xlu0 %1700, %v1662
  %v1702 = vpop.permute.xlu0 %1701
  %1703 = vset.pattern.permute.xlu0 0
  %1704 = vperm.xlu0 %1703, %v1663
  %v1705 = vpop.permute.xlu0 %1704
  %1706 = vset.pattern.permute.xlu0 0
  %1707 = vperm.xlu0 %1706, %v1664
  %v1708 = vpop.permute.xlu0 %1707
  %1709 = vset.pattern.permute.xlu0 0
  %1710 = vperm.xlu0 %1709, %v1665
  %v1711 = vpop.permute.xlu0 %1710
  %1712 = vset.pattern.permute.xlu0 0
  %1713 = vperm.xlu0 %1712, %v1666
  %v1714 = vpop.permute.xlu0 %1713
  %vm1715 = vcmp.eq.s32.totalorder %v1650, %v1669
  %vm1716 = vcmp.eq.s32.totalorder %v1650, %v1672
  %vm1717 = vcmp.eq.s32.totalorder %v1650, %v1675
  %vm1718 = vcmp.eq.s32.totalorder %v1650, %v1678
  %vm1719 = vcmp.eq.s32.totalorder %v1650, %v1681
  %vm1720 = vcmp.eq.s32.totalorder %v1650, %v1684
  %vm1721 = vcmp.eq.s32.totalorder %v1650, %v1687
  %vm1722 = vcmp.eq.s32.totalorder %v1650, %v1690
  %vm1723 = vcmp.eq.s32.totalorder %v1650, %v1693
  %vm1724 = vcmp.eq.s32.totalorder %v1650, %v1696
  %vm1725 = vcmp.eq.s32.totalorder %v1650, %v1699
  %vm1726 = vcmp.eq.s32.totalorder %v1650, %v1702
  %vm1727 = vcmp.eq.s32.totalorder %v1650, %v1705
  %vm1728 = vcmp.eq.s32.totalorder %v1650, %v1708
  %vm1729 = vcmp.eq.s32.totalorder %v1650, %v1711
  %vm1730 = vcmp.eq.s32.totalorder %v1650, %v1714
  %v1731 = vsel %vm1715, %v1633, 0.0
  %v1732 = vsel %vm1716, %v1634, 0.0
  %v1733 = vsel %vm1717, %v1635, 0.0
  %v1734 = vsel %vm1718, %v1636, 0.0
  %v1735 = vsel %vm1719, %v1637, 0.0
  %v1736 = vsel %vm1720, %v1638, 0.0
  %v1737 = vsel %vm1721, %v1639, 0.0
  %v1738 = vsel %vm1722, %v1640, 0.0
  %v1739 = vsel %vm1723, %v1641, 0.0
  %v1740 = vsel %vm1724, %v1642, 0.0
  %v1741 = vsel %vm1725, %v1643, 0.0
  %v1742 = vsel %vm1726, %v1644, 0.0
  %v1743 = vsel %vm1727, %v1645, 0.0
  %v1744 = vsel %vm1728, %v1646, 0.0
  %v1745 = vsel %vm1729, %v1647, 0.0
  %v1746 = vsel %vm1730, %v1648, 0.0
  %v1747 = vsel %vm1456, %v1731, 0.0
  %1748 = vadd.xlane.f32.xlu0 %v1747
  %v1749 = vpop.xlane.xlu0 %1748
  %v1750 = vsel %vm1456, %v1732, 0.0
  %1751 = vadd.xlane.f32.xlu0 %v1750
  %v1752 = vpop.xlane.xlu0 %1751
  %v1753 = vsel %vm1456, %v1733, 0.0
  %1754 = vadd.xlane.f32.xlu0 %v1753
  %v1755 = vpop.xlane.xlu0 %1754
  %v1756 = vsel %vm1456, %v1734, 0.0
  %1757 = vadd.xlane.f32.xlu0 %v1756
  %v1758 = vpop.xlane.xlu0 %1757
  %v1759 = vsel %vm1456, %v1735, 0.0
  %1760 = vadd.xlane.f32.xlu0 %v1759
  %v1761 = vpop.xlane.xlu0 %1760
  %v1762 = vsel %vm1456, %v1736, 0.0
  %1763 = vadd.xlane.f32.xlu0 %v1762
  %v1764 = vpop.xlane.xlu0 %1763
  %v1765 = vsel %vm1456, %v1737, 0.0
  %1766 = vadd.xlane.f32.xlu0 %v1765
  %v1767 = vpop.xlane.xlu0 %1766
  %v1768 = vsel %vm1456, %v1738, 0.0
  %1769 = vadd.xlane.f32.xlu0 %v1768
  %v1770 = vpop.xlane.xlu0 %1769
  %v1771 = vsel %vm1456, %v1739, 0.0
  %1772 = vadd.xlane.f32.xlu0 %v1771
  %v1773 = vpop.xlane.xlu0 %1772
  %v1774 = vsel %vm1456, %v1740, 0.0
  %1775 = vadd.xlane.f32.xlu0 %v1774
  %v1776 = vpop.xlane.xlu0 %1775
  %v1777 = vsel %vm1456, %v1741, 0.0
  %1778 = vadd.xlane.f32.xlu0 %v1777
  %v1779 = vpop.xlane.xlu0 %1778
  %v1780 = vsel %vm1456, %v1742, 0.0
  %1781 = vadd.xlane.f32.xlu0 %v1780
  %v1782 = vpop.xlane.xlu0 %1781
  %v1783 = vsel %vm1456, %v1743, 0.0
  %1784 = vadd.xlane.f32.xlu0 %v1783
  %v1785 = vpop.xlane.xlu0 %1784
  %v1786 = vsel %vm1456, %v1744, 0.0
  %1787 = vadd.xlane.f32.xlu0 %v1786
  %v1788 = vpop.xlane.xlu0 %1787
  %v1789 = vsel %vm1456, %v1745, 0.0
  %1790 = vadd.xlane.f32.xlu0 %v1789
  %v1791 = vpop.xlane.xlu0 %1790
  %v1792 = vsel %vm1456, %v1746, 0.0
  %1793 = vadd.xlane.f32.xlu0 %v1792
  %v1794 = vpop.xlane.xlu0 %1793
  %v1795 = vsub.f32 0.0, %v1749
  %v1796 = vsub.f32 0.0, %v1752
  %v1797 = vsub.f32 0.0, %v1755
  %v1798 = vsub.f32 0.0, %v1758
  %v1799 = vsub.f32 0.0, %v1761
  %v1800 = vsub.f32 0.0, %v1764
  %v1801 = vsub.f32 0.0, %v1767
  %v1802 = vsub.f32 0.0, %v1770
  %v1803 = vsub.f32 0.0, %v1773
  %v1804 = vsub.f32 0.0, %v1776
  %v1805 = vsub.f32 0.0, %v1779
  %v1806 = vsub.f32 0.0, %v1782
  %v1807 = vsub.f32 0.0, %v1785
  %v1808 = vsub.f32 0.0, %v1788
  %v1809 = vsub.f32 0.0, %v1791
  %v1810 = vsub.f32 0.0, %v1794
  %v1811 = vadd.f32 %v1795, %v1796
  %v1812 = vadd.f32 %v1811, %v1797
  %v1813 = vadd.f32 %v1812, %v1798
  %v1814 = vadd.f32 %v1813, %v1799
  %v1815 = vadd.f32 %v1814, %v1800
  %v1816 = vadd.f32 %v1815, %v1801
  %v1817 = vadd.f32 %v1816, %v1802
  %v1818 = vadd.f32 %v1817, %v1803
  %v1819 = vadd.f32 %v1818, %v1804
  %v1820 = vadd.f32 %v1819, %v1805
  %v1821 = vadd.f32 %v1820, %v1806
  %v1822 = vadd.f32 %v1821, %v1807
  %v1823 = vadd.f32 %v1822, %v1808
  %v1824 = vadd.f32 %v1823, %v1809
  %v1825 = vadd.f32 %v1824, %v1810
  %v1826 = vrot.slane %v1825, 4
  %v1827 = vadd.f32 %v1825, %v1826
  %v1828 = vrot.slane %v1827, 2
  %v1829 = vadd.f32 %v1827, %v1828
  %v1830 = vrot.slane %v1829, 1
  %v1831 = vadd.f32 %v1829, %v1830
  %1832 = vst [vmem:[%s6] sm:$0x1] %v1831
  // Predicated region
  $region26: #{basemodel_forward.1} parent=0 // pred_check
    _
  $region27: #{basemodel_forward.1} parent=0 // pred_check_branch
    %1834 = sbr.rel (0) target = $region29
  $region28: #{basemodel_forward.1} parent=0 // pred_region
    _
  $region29: #{basemodel_forward.1} parent=0 // pred_fallthru
    _
  // Predicated region
  $region30: #{basemodel_forward.1} parent=0 // pred_check
    _
  $region31: #{basemodel_forward.1} parent=0 // pred_check_branch
    %1836 = sbr.rel (0) target = $region33
  $region32: #{basemodel_forward.1} parent=0 // pred_region
    _
  $region33: #{basemodel_forward.1} parent=0 // pred_fallthru
    _

</llo_original>
